<compile_context>
chip_gen: v6e
topology: v6e:2x2x1
jax: 0.10.0
libtpu: 0.0.40
codegen_flags: <defaults>
</compile_context>

<pallas_src>
import functools

import numpy as np
import jax
import jax.numpy as jnp
from jax import lax
from jax.experimental import pallas as pl
from jax.experimental.pallas import tpu as pltpu

# --- ELLoss constants (from __init__) ---
ETA = 0.001
LAMBDA = 2.0
BETA = 1.0
ALPHA_HAT = 100.9375 * BETA
EPS_HAT = 0.25 * BETA

# --- slab row layout (every row is one flattened (H*W,) map, lane-dense) ---
ROW_SRC = 0      # im_src
ROW_REF = 1      # im_ref
ROW_D = 2        # d
ROW_V = 3        # v
ROW_HPHI = 4     # H(phi)
ROW_WXY = 5      # 4 rows: bilinear corner weights for xy
ROW_WG = 9       # 4 rows: bilinear corner weights for g
ROW_IXY = 13     # 4 rows: flat corner indices for xy (stored as f32, exact)
ROW_IG = 17      # 4 rows: flat corner indices for g (stored as f32, exact)
ROW_GYM = 21     # 1 row : validity mask for the j-direction central difference
N_ROWS = 22


# ----------------------------------------------------------------------------
# Pallas kernel: in-kernel grid_sample gather (one-hot + MXU), constant-matrix
# identity resample, finite-difference L1 reductions, energy map and mean.
# Single no-grid invocation; everything fits in VMEM.
# ----------------------------------------------------------------------------
def _el_loss_kernel(slab_ref, kt_ref, out_ref, *, h, w):
    n = h * w
    eta2 = ETA * ETA

    # Rows 0..7 (src, ref, d, v, hphi, wxy[0:3]) as one aligned MXU LHS tile;
    # rows other than the one we slice out afterwards are free MXU filler.
    lhs8 = slab_ref[0:8, :]                                   # (8, n)
    kcol = lax.broadcasted_iota(jnp.int32, (n, n), 0)         # kcol[k, p] = k

    def sampling_matrix_t(idx_row0, w_row0):
        # S^T[k, p] = sum_c w_c[p] * (idx_c[p] == k): the bilinear gather of
        # grid_sample(bilinear, border, align_corners=False) as a matrix.
        st = None
        for c in range(4):
            idx_c = slab_ref[idx_row0 + c:idx_row0 + c + 1, :].astype(jnp.int32)  # (1, n)
            w_c = slab_ref[w_row0 + c:w_row0 + c + 1, :]                          # (1, n)
            term = jnp.where(kcol == idx_c, w_c, 0.0)
            st = term if st is None else st + term
        return st                                              # (n, n)

    s_xy_t = sampling_matrix_t(ROW_IXY, ROW_WXY)
    s_g_t = sampling_matrix_t(ROW_IG, ROW_WG)
    i1 = jnp.dot(lhs8, s_xy_t,
                 preferred_element_type=jnp.float32)[ROW_SRC:ROW_SRC + 1, :]   # I1_xy
    i2 = jnp.dot(lhs8, s_g_t,
                 preferred_element_type=jnp.float32)[ROW_REF:ROW_REF + 1, :]   # I2_g

    # Identity-grid resample (get_pixel_values(..., None)) of d and v as one
    # constant matmul against kron(Rh, Rw)^T.
    dv_s = jnp.dot(lhs8, kt_ref[...],
                   preferred_element_type=jnp.float32)[ROW_D:ROW_V + 1, :]     # (2, n)

    gy_mask = slab_ref[ROW_GYM:ROW_GYM + 1, :][:, :n - 2]      # (1, n-2)

    def grad_l1_rows(x):
        # x: (r, n) rows of flattened (h, w) maps.  L1 of torch grad(): the
        # output zero padding contributes nothing, so sum only the interior
        # central differences.  Row-direction stride = 2*w (contiguous, no mask);
        # col-direction stride = 2, masked where the pair wraps across a row.
        gx = (x[:, 2 * w:] - x[:, :n - 2 * w]) * 0.5
        gy = (x[:, 2:] - x[:, :n - 2]) * 0.5
        return (jnp.sum(jnp.abs(gx), axis=1, keepdims=True)
                + jnp.sum(jnp.abs(gy) * gy_mask, axis=1, keepdims=True))       # (r, 1)

    diff = i2 - i1
    l1_i = jnp.sum(jnp.abs(diff), keepdims=True)               # ||I2_g - I1_xy||_1
    l1_gi = grad_l1_rows(diff)                                 # ||grad I2 - grad I1||_1
    sd2 = l1_i * l1_i + LAMBDA * (l1_gi * l1_gi)
    e_d = jnp.sqrt(sd2 + eta2)                                 # (1, 1)

    g_dv = grad_l1_rows(dv_s)                                  # (2, 1)
    l1_gd = g_dv[0:1, 0:1]
    l1_gv = g_dv[1:2, 0:1]
    e_s = BETA * jnp.sqrt(l1_gd * l1_gd + eta2)                # (1, 1)

    v_row = slab_ref[ROW_V:ROW_V + 1, :]                       # raw v, (1, n)
    hphi = slab_ref[ROW_HPHI:ROW_HPHI + 1, :]                  # H(phi), (1, n)
    out_map = ((e_d + e_s * v_row * v_row + ALPHA_HAT * (v_row - 1.0) ** 2) * hphi
               + EPS_HAT * (l1_gv * l1_gv))                    # (1, n)
    mean = jnp.sum(out_map, keepdims=True) * (1.0 / float(n))  # (1, 1)

    # Single lane-padded output: lanes 0,1,2 = mean, e_s, e_d.
    lane = lax.broadcasted_iota(jnp.int32, (1, 128), 1)
    out_ref[...] = (jnp.where(lane == 0, mean, 0.0)
                    + jnp.where(lane == 1, e_s, 0.0)
                    + jnp.where(lane == 2, e_d, 0.0))


# ----------------------------------------------------------------------------
# Glue: corner index / weight setup (data-dependent, tiny elementwise math) and
# trace-time constants.  No gathers and no per-map intermediates in XLA.
# ----------------------------------------------------------------------------
def _corners_flat(coords, h, w):
    """Bilinear corner flat indices and weights for grid_sample(bilinear,
    padding_mode='border', align_corners=False).  coords: (h*w, 2) in [0, 1],
    last dim = (x, y) as in torch.grid_sample."""
    xn = coords[:, 0].astype(jnp.float32) * 2.0 - 1.0
    yn = coords[:, 1].astype(jnp.float32) * 2.0 - 1.0
    ix = jnp.clip(((xn + 1.0) * w - 1.0) * 0.5, 0.0, float(w - 1))
    iy = jnp.clip(((yn + 1.0) * h - 1.0) * 0.5, 0.0, float(h - 1))
    x0f = jnp.floor(ix)
    y0f = jnp.floor(iy)
    wx = ix - x0f
    wy = iy - y0f
    x0 = x0f.astype(jnp.int32)
    y0 = y0f.astype(jnp.int32)
    x1 = jnp.minimum(x0 + 1, w - 1)   # the +1 corner only matters when its weight > 0
    y1 = jnp.minimum(y0 + 1, h - 1)
    idx = jnp.stack([y0 * w + x0, y0 * w + x1, y1 * w + x0, y1 * w + x1], axis=0)
    wts = jnp.stack([(1.0 - wy) * (1.0 - wx), (1.0 - wy) * wx,
                     wy * (1.0 - wx), wy * wx], axis=0)
    return idx, wts.astype(jnp.float32)                         # (4, n) each


def _resample_matrix(size):
    """(size, size) matrix of the 1-D bilinear resample performed by
    get_pixel_values(image, None): linspace(-1,1,size) grid, align_corners=False,
    border padding.  Pure numpy -> trace-time constant."""
    coord = np.linspace(-1.0, 1.0, size)
    src = np.clip(((coord + 1.0) * size - 1.0) * 0.5, 0.0, size - 1.0)
    i0 = np.floor(src).astype(np.int64)
    frac = src - i0
    i1 = np.minimum(i0 + 1, size - 1)
    r = np.zeros((size, size), np.float64)
    for o in range(size):
        r[o, i0[o]] += 1.0 - frac[o]
        r[o, i1[o]] += frac[o]
    return r


# ----------------------------------------------------------------------------
# ELLoss forward
# ----------------------------------------------------------------------------
@functools.partial(jax.jit, static_argnames=("im_side",))
def el_loss_forward(g, xy, d, phi, v, im_side, im_l, im_r):
    h, w = im_l.shape
    n = h * w
    if im_side == "left":
        im_src, im_ref = im_l, im_r
    else:
        im_src, im_ref = im_r, im_l

    idx_xy, w_xy = _corners_flat(xy, h, w)
    idx_g, w_g = _corners_flat(g, h, w)

    # H(phi) = 0.5 * (1 + 2*arctan(phi/0.1)/pi)   (arctan kept in glue, see TODO)
    hphi = 0.5 * (1.0 + 2.0 * jnp.arctan(phi.astype(jnp.float32) / 0.1) / jnp.pi)

    # trace-time constants (depend only on the static image size)
    gy_valid = ((np.arange(n) % w) <= (w - 3)).astype(np.float32).reshape(1, n)
    kt = np.kron(_resample_matrix(h), _resample_matrix(w)).T.astype(np.float32)

    # Single lane-dense (22, 256) f32 input slab.
    slab = jnp.concatenate([
        im_src.reshape(1, n).astype(jnp.float32),
        im_ref.reshape(1, n).astype(jnp.float32),
        d.reshape(1, n).astype(jnp.float32),
        v.reshape(1, n).astype(jnp.float32),
        hphi.reshape(1, n),
        w_xy,
        w_g,
        idx_xy.astype(jnp.float32),
        idx_g.astype(jnp.float32),
        jnp.asarray(gy_valid),
    ], axis=0)

    vmem = pl.BlockSpec(memory_space=pltpu.MemorySpace.VMEM)
    out = pl.pallas_call(
        functools.partial(_el_loss_kernel, h=h, w=w),
        out_shape=jax.ShapeDtypeStruct((1, 128), jnp.float32),
        in_specs=[vmem, vmem],
        out_specs=vmem,
    )(slab, jnp.asarray(kt))

    return out[0, 0], out[0, 1], out[0, 2]


if __name__ == "__main__":
    key = jax.random.PRNGKey(0)
    H_IMG, W_IMG = 16, 16
    N = H_IMG * W_IMG

    ks = jax.random.split(key, 7)
    # Deterministic synthetic "images" (the module's im_l / im_r parameters).
    im_l = jax.random.uniform(ks[0], (H_IMG, W_IMG), jnp.float32)
    im_r = jax.random.uniform(ks[1], (H_IMG, W_IMG), jnp.float32)

    # Forward inputs.
    xy = jax.random.uniform(ks[2], (N, 2), jnp.float32)                     # coords in [0,1]
    g = jax.random.uniform(ks[3], (N, 2), jnp.float32)                      # warped coords in [0,1]
    d = jax.random.uniform(ks[4], (N,), jnp.float32)                        # disparity field
    phi = jax.random.uniform(ks[5], (N,), jnp.float32, minval=-1.0, maxval=1.0)
    v = jax.random.uniform(ks[6], (N,), jnp.float32, minval=0.5, maxval=1.5)

    out = el_loss_forward(g, xy, d, phi, v, "left", im_l, im_r)
    out = jax.block_until_ready(out)
    print("KERNEL_OK")
</pallas_src>

<mosaic_0001>
module attributes {stable_mosaic.version = 11 : i64} {
  func.func @_el_loss_kernel(%arg0: memref<22x256xf32, #tpu.memory_space<vmem>>, %arg1: memref<256x256xf32, #tpu.memory_space<vmem>>, %arg2: memref<1x128xf32, #tpu.memory_space<vmem>>) attributes {dimension_semantics = [], scalar_prefetch = 0 : i64, scratch_operands = 0 : i64, tpu.core_type = #tpu.core_type<tc>} {
    %c0 = arith.constant 0 : index
    %c0_0 = arith.constant 0 : index
    %0 = vector.load %arg0[%c0, %c0_0] : memref<22x256xf32, #tpu.memory_space<vmem>>, vector<8x256xf32>
    %1 = tpu.iota {dimensions = array<i32: 0>} : vector<256x256xi32>
    %c13 = arith.constant 13 : index
    %c0_1 = arith.constant 0 : index
    %2 = vector.load %arg0[%c13, %c0_1] : memref<22x256xf32, #tpu.memory_space<vmem>>, vector<1x256xf32>
    %3 = arith.fptosi %2 : vector<1x256xf32> to vector<1x256xi32>
    %c5 = arith.constant 5 : index
    %c0_2 = arith.constant 0 : index
    %4 = vector.load %arg0[%c5, %c0_2] : memref<22x256xf32, #tpu.memory_space<vmem>>, vector<1x256xf32>
    %5 = vector.broadcast %3 : vector<1x256xi32> to vector<256x256xi32>
    %6 = arith.cmpi eq, %1, %5 : vector<256x256xi32>
    %cst = arith.constant 0.000000e+00 : f32
    %7 = vector.shape_cast %4 : vector<1x256xf32> to vector<1x256xf32>
    %8 = vector.broadcast %7 : vector<1x256xf32> to vector<256x256xf32>
    %9 = vector.broadcast %cst : f32 to vector<256x256xf32>
    %10 = arith.select %6, %8, %9 : vector<256x256xi1>, vector<256x256xf32>
    %c14 = arith.constant 14 : index
    %c0_3 = arith.constant 0 : index
    %11 = vector.load %arg0[%c14, %c0_3] : memref<22x256xf32, #tpu.memory_space<vmem>>, vector<1x256xf32>
    %12 = arith.fptosi %11 : vector<1x256xf32> to vector<1x256xi32>
    %c6 = arith.constant 6 : index
    %c0_4 = arith.constant 0 : index
    %13 = vector.load %arg0[%c6, %c0_4] : memref<22x256xf32, #tpu.memory_space<vmem>>, vector<1x256xf32>
    %14 = vector.broadcast %12 : vector<1x256xi32> to vector<256x256xi32>
    %15 = arith.cmpi eq, %1, %14 : vector<256x256xi32>
    %cst_5 = arith.constant 0.000000e+00 : f32
    %16 = vector.shape_cast %13 : vector<1x256xf32> to vector<1x256xf32>
    %17 = vector.broadcast %16 : vector<1x256xf32> to vector<256x256xf32>
    %18 = vector.broadcast %cst_5 : f32 to vector<256x256xf32>
    %19 = arith.select %15, %17, %18 : vector<256x256xi1>, vector<256x256xf32>
    %20 = arith.addf %10, %19 : vector<256x256xf32>
    %c15 = arith.constant 15 : index
    %c0_6 = arith.constant 0 : index
    %21 = vector.load %arg0[%c15, %c0_6] : memref<22x256xf32, #tpu.memory_space<vmem>>, vector<1x256xf32>
    %22 = arith.fptosi %21 : vector<1x256xf32> to vector<1x256xi32>
    %c7 = arith.constant 7 : index
    %c0_7 = arith.constant 0 : index
    %23 = vector.load %arg0[%c7, %c0_7] : memref<22x256xf32, #tpu.memory_space<vmem>>, vector<1x256xf32>
    %24 = vector.broadcast %22 : vector<1x256xi32> to vector<256x256xi32>
    %25 = arith.cmpi eq, %1, %24 : vector<256x256xi32>
    %cst_8 = arith.constant 0.000000e+00 : f32
    %26 = vector.shape_cast %23 : vector<1x256xf32> to vector<1x256xf32>
    %27 = vector.broadcast %26 : vector<1x256xf32> to vector<256x256xf32>
    %28 = vector.broadcast %cst_8 : f32 to vector<256x256xf32>
    %29 = arith.select %25, %27, %28 : vector<256x256xi1>, vector<256x256xf32>
    %30 = arith.addf %20, %29 : vector<256x256xf32>
    %c16 = arith.constant 16 : index
    %c0_9 = arith.constant 0 : index
    %31 = vector.load %arg0[%c16, %c0_9] : memref<22x256xf32, #tpu.memory_space<vmem>>, vector<1x256xf32>
    %32 = arith.fptosi %31 : vector<1x256xf32> to vector<1x256xi32>
    %c8 = arith.constant 8 : index
    %c0_10 = arith.constant 0 : index
    %33 = vector.load %arg0[%c8, %c0_10] : memref<22x256xf32, #tpu.memory_space<vmem>>, vector<1x256xf32>
    %34 = vector.broadcast %32 : vector<1x256xi32> to vector<256x256xi32>
    %35 = arith.cmpi eq, %1, %34 : vector<256x256xi32>
    %cst_11 = arith.constant 0.000000e+00 : f32
    %36 = vector.shape_cast %33 : vector<1x256xf32> to vector<1x256xf32>
    %37 = vector.broadcast %36 : vector<1x256xf32> to vector<256x256xf32>
    %38 = vector.broadcast %cst_11 : f32 to vector<256x256xf32>
    %39 = arith.select %35, %37, %38 : vector<256x256xi1>, vector<256x256xf32>
    %40 = arith.addf %30, %39 : vector<256x256xf32>
    %c17 = arith.constant 17 : index
    %c0_12 = arith.constant 0 : index
    %41 = vector.load %arg0[%c17, %c0_12] : memref<22x256xf32, #tpu.memory_space<vmem>>, vector<1x256xf32>
    %42 = arith.fptosi %41 : vector<1x256xf32> to vector<1x256xi32>
    %c9 = arith.constant 9 : index
    %c0_13 = arith.constant 0 : index
    %43 = vector.load %arg0[%c9, %c0_13] : memref<22x256xf32, #tpu.memory_space<vmem>>, vector<1x256xf32>
    %44 = vector.broadcast %42 : vector<1x256xi32> to vector<256x256xi32>
    %45 = arith.cmpi eq, %1, %44 : vector<256x256xi32>
    %cst_14 = arith.constant 0.000000e+00 : f32
    %46 = vector.shape_cast %43 : vector<1x256xf32> to vector<1x256xf32>
    %47 = vector.broadcast %46 : vector<1x256xf32> to vector<256x256xf32>
    %48 = vector.broadcast %cst_14 : f32 to vector<256x256xf32>
    %49 = arith.select %45, %47, %48 : vector<256x256xi1>, vector<256x256xf32>
    %c18 = arith.constant 18 : index
    %c0_15 = arith.constant 0 : index
    %50 = vector.load %arg0[%c18, %c0_15] : memref<22x256xf32, #tpu.memory_space<vmem>>, vector<1x256xf32>
    %51 = arith.fptosi %50 : vector<1x256xf32> to vector<1x256xi32>
    %c10 = arith.constant 10 : index
    %c0_16 = arith.constant 0 : index
    %52 = vector.load %arg0[%c10, %c0_16] : memref<22x256xf32, #tpu.memory_space<vmem>>, vector<1x256xf32>
    %53 = vector.broadcast %51 : vector<1x256xi32> to vector<256x256xi32>
    %54 = arith.cmpi eq, %1, %53 : vector<256x256xi32>
    %cst_17 = arith.constant 0.000000e+00 : f32
    %55 = vector.shape_cast %52 : vector<1x256xf32> to vector<1x256xf32>
    %56 = vector.broadcast %55 : vector<1x256xf32> to vector<256x256xf32>
    %57 = vector.broadcast %cst_17 : f32 to vector<256x256xf32>
    %58 = arith.select %54, %56, %57 : vector<256x256xi1>, vector<256x256xf32>
    %59 = arith.addf %49, %58 : vector<256x256xf32>
    %c19 = arith.constant 19 : index
    %c0_18 = arith.constant 0 : index
    %60 = vector.load %arg0[%c19, %c0_18] : memref<22x256xf32, #tpu.memory_space<vmem>>, vector<1x256xf32>
    %61 = arith.fptosi %60 : vector<1x256xf32> to vector<1x256xi32>
    %c11 = arith.constant 11 : index
    %c0_19 = arith.constant 0 : index
    %62 = vector.load %arg0[%c11, %c0_19] : memref<22x256xf32, #tpu.memory_space<vmem>>, vector<1x256xf32>
    %63 = vector.broadcast %61 : vector<1x256xi32> to vector<256x256xi32>
    %64 = arith.cmpi eq, %1, %63 : vector<256x256xi32>
    %cst_20 = arith.constant 0.000000e+00 : f32
    %65 = vector.shape_cast %62 : vector<1x256xf32> to vector<1x256xf32>
    %66 = vector.broadcast %65 : vector<1x256xf32> to vector<256x256xf32>
    %67 = vector.broadcast %cst_20 : f32 to vector<256x256xf32>
    %68 = arith.select %64, %66, %67 : vector<256x256xi1>, vector<256x256xf32>
    %69 = arith.addf %59, %68 : vector<256x256xf32>
    %c20 = arith.constant 20 : index
    %c0_21 = arith.constant 0 : index
    %70 = vector.load %arg0[%c20, %c0_21] : memref<22x256xf32, #tpu.memory_space<vmem>>, vector<1x256xf32>
    %71 = arith.fptosi %70 : vector<1x256xf32> to vector<1x256xi32>
    %c12 = arith.constant 12 : index
    %c0_22 = arith.constant 0 : index
    %72 = vector.load %arg0[%c12, %c0_22] : memref<22x256xf32, #tpu.memory_space<vmem>>, vector<1x256xf32>
    %73 = vector.broadcast %71 : vector<1x256xi32> to vector<256x256xi32>
    %74 = arith.cmpi eq, %1, %73 : vector<256x256xi32>
    %cst_23 = arith.constant 0.000000e+00 : f32
    %75 = vector.shape_cast %72 : vector<1x256xf32> to vector<1x256xf32>
    %76 = vector.broadcast %75 : vector<1x256xf32> to vector<256x256xf32>
    %77 = vector.broadcast %cst_23 : f32 to vector<256x256xf32>
    %78 = arith.select %74, %76, %77 : vector<256x256xi1>, vector<256x256xf32>
    %79 = arith.addf %69, %78 : vector<256x256xf32>
    %cst_24 = arith.constant dense<0.000000e+00> : vector<8x256xf32>
    %80 = tpu.matmul %0, %40, %cst_24 {dimension_numbers = #tpu.dot_dimension_numbers<[1], [0], [0], [1], [0, 0, 1, 1], [], []>} : vector<8x256xf32>, vector<256x256xf32>, vector<8x256xf32> -> vector<8x256xf32>
    %81 = vector.extract_strided_slice %80 {offsets = [0, 0], sizes = [1, 256], strides = [1, 1]} : vector<8x256xf32> to vector<1x256xf32>
    %cst_25 = arith.constant dense<0.000000e+00> : vector<8x256xf32>
    %82 = tpu.matmul %0, %79, %cst_25 {dimension_numbers = #tpu.dot_dimension_numbers<[1], [0], [0], [1], [0, 0, 1, 1], [], []>} : vector<8x256xf32>, vector<256x256xf32>, vector<8x256xf32> -> vector<8x256xf32>
    %83 = vector.extract_strided_slice %82 {offsets = [1, 0], sizes = [1, 256], strides = [1, 1]} : vector<8x256xf32> to vector<1x256xf32>
    %c0_26 = arith.constant 0 : index
    %c0_27 = arith.constant 0 : index
    %84 = vector.load %arg1[%c0_26, %c0_27] : memref<256x256xf32, #tpu.memory_space<vmem>>, vector<256x256xf32>
    %cst_28 = arith.constant dense<0.000000e+00> : vector<8x256xf32>
    %85 = tpu.matmul %0, %84, %cst_28 {dimension_numbers = #tpu.dot_dimension_numbers<[1], [0], [0], [1], [0, 0, 1, 1], [], []>} : vector<8x256xf32>, vector<256x256xf32>, vector<8x256xf32> -> vector<8x256xf32>
    %86 = vector.extract_strided_slice %85 {offsets = [2, 0], sizes = [2, 256], strides = [1, 1]} : vector<8x256xf32> to vector<2x256xf32>
    %c21 = arith.constant 21 : index
    %c0_29 = arith.constant 0 : index
    %87 = vector.load %arg0[%c21, %c0_29] : memref<22x256xf32, #tpu.memory_space<vmem>>, vector<1x256xf32>
    %88 = vector.extract_strided_slice %87 {offsets = [0, 0], sizes = [1, 254], strides = [1, 1]} : vector<1x256xf32> to vector<1x254xf32>
    %89 = arith.subf %83, %81 : vector<1x256xf32>
    %90 = math.absf %89 : vector<1x256xf32>
    %91 = vector.shape_cast %90 : vector<1x256xf32> to vector<1x1x256xf32>
    %cst_30 = arith.constant dense<0.000000e+00> : vector<1xf32>
    %92 = vector.multi_reduction <add>, %91, %cst_30 [1, 2] : vector<1x1x256xf32> to vector<1xf32>
    %93 = vector.shape_cast %92 : vector<1xf32> to vector<1x1x1xf32>
    %94 = vector.extract %93[0, 0, 0] : f32 from vector<1x1x1xf32>
    %95 = vector.broadcast %94 : f32 to vector<1x1xf32>
    %96 = vector.extract_strided_slice %89 {offsets = [0, 32], sizes = [1, 224], strides = [1, 1]} : vector<1x256xf32> to vector<1x224xf32>
    %97 = vector.extract_strided_slice %89 {offsets = [0, 0], sizes = [1, 224], strides = [1, 1]} : vector<1x256xf32> to vector<1x224xf32>
    %98 = arith.subf %96, %97 : vector<1x224xf32>
    %cst_31 = arith.constant 5.000000e-01 : f32
    %99 = vector.broadcast %cst_31 : f32 to vector<1x224xf32>
    %100 = arith.mulf %98, %99 : vector<1x224xf32>
    %101 = vector.extract_strided_slice %89 {offsets = [0, 2], sizes = [1, 254], strides = [1, 1]} : vector<1x256xf32> to vector<1x254xf32>
    %102 = vector.extract_strided_slice %89 {offsets = [0, 0], sizes = [1, 254], strides = [1, 1]} : vector<1x256xf32> to vector<1x254xf32>
    %103 = arith.subf %101, %102 : vector<1x254xf32>
    %cst_32 = arith.constant 5.000000e-01 : f32
    %104 = vector.broadcast %cst_32 : f32 to vector<1x254xf32>
    %105 = arith.mulf %103, %104 : vector<1x254xf32>
    %106 = math.absf %100 : vector<1x224xf32>
    %cst_33 = arith.constant dense<0.000000e+00> : vector<1xf32>
    %107 = vector.multi_reduction <add>, %106, %cst_33 [1] : vector<1x224xf32> to vector<1xf32>
    %108 = vector.shape_cast %107 : vector<1xf32> to vector<1x1xf32>
    %109 = math.absf %105 : vector<1x254xf32>
    %110 = arith.mulf %109, %88 : vector<1x254xf32>
    %cst_34 = arith.constant dense<0.000000e+00> : vector<1xf32>
    %111 = vector.multi_reduction <add>, %110, %cst_34 [1] : vector<1x254xf32> to vector<1xf32>
    %112 = vector.shape_cast %111 : vector<1xf32> to vector<1x1xf32>
    %113 = arith.addf %108, %112 : vector<1x1xf32>
    %114 = arith.mulf %95, %95 : vector<1x1xf32>
    %115 = arith.mulf %113, %113 : vector<1x1xf32>
    %cst_35 = arith.constant 2.000000e+00 : f32
    %116 = vector.broadcast %cst_35 : f32 to vector<1x1xf32>
    %117 = arith.mulf %116, %115 : vector<1x1xf32>
    %118 = arith.addf %114, %117 : vector<1x1xf32>
    %cst_36 = arith.constant 9.99999997E-7 : f32
    %119 = vector.broadcast %cst_36 : f32 to vector<1x1xf32>
    %120 = arith.addf %118, %119 : vector<1x1xf32>
    %121 = math.sqrt %120 : vector<1x1xf32>
    %122 = vector.extract_strided_slice %86 {offsets = [0, 32], sizes = [2, 224], strides = [1, 1]} : vector<2x256xf32> to vector<2x224xf32>
    %123 = vector.extract_strided_slice %86 {offsets = [0, 0], sizes = [2, 224], strides = [1, 1]} : vector<2x256xf32> to vector<2x224xf32>
    %124 = arith.subf %122, %123 : vector<2x224xf32>
    %cst_37 = arith.constant 5.000000e-01 : f32
    %125 = vector.broadcast %cst_37 : f32 to vector<2x224xf32>
    %126 = arith.mulf %124, %125 : vector<2x224xf32>
    %127 = vector.extract_strided_slice %86 {offsets = [0, 2], sizes = [2, 254], strides = [1, 1]} : vector<2x256xf32> to vector<2x254xf32>
    %128 = vector.extract_strided_slice %86 {offsets = [0, 0], sizes = [2, 254], strides = [1, 1]} : vector<2x256xf32> to vector<2x254xf32>
    %129 = arith.subf %127, %128 : vector<2x254xf32>
    %cst_38 = arith.constant 5.000000e-01 : f32
    %130 = vector.broadcast %cst_38 : f32 to vector<2x254xf32>
    %131 = arith.mulf %129, %130 : vector<2x254xf32>
    %132 = math.absf %126 : vector<2x224xf32>
    %cst_39 = arith.constant dense<0.000000e+00> : vector<2xf32>
    %133 = vector.multi_reduction <add>, %132, %cst_39 [1] : vector<2x224xf32> to vector<2xf32>
    %134 = vector.shape_cast %133 : vector<2xf32> to vector<2x1xf32>
    %135 = math.absf %131 : vector<2x254xf32>
    %136 = vector.broadcast %88 : vector<1x254xf32> to vector<2x254xf32>
    %137 = arith.mulf %135, %136 : vector<2x254xf32>
    %cst_40 = arith.constant dense<0.000000e+00> : vector<2xf32>
    %138 = vector.multi_reduction <add>, %137, %cst_40 [1] : vector<2x254xf32> to vector<2xf32>
    %139 = vector.shape_cast %138 : vector<2xf32> to vector<2x1xf32>
    %140 = arith.addf %134, %139 : vector<2x1xf32>
    %141 = vector.extract_strided_slice %140 {offsets = [0, 0], sizes = [1, 1], strides = [1, 1]} : vector<2x1xf32> to vector<1x1xf32>
    %142 = vector.extract_strided_slice %140 {offsets = [1, 0], sizes = [1, 1], strides = [1, 1]} : vector<2x1xf32> to vector<1x1xf32>
    %143 = arith.mulf %141, %141 : vector<1x1xf32>
    %cst_41 = arith.constant 9.99999997E-7 : f32
    %144 = vector.broadcast %cst_41 : f32 to vector<1x1xf32>
    %145 = arith.addf %143, %144 : vector<1x1xf32>
    %146 = math.sqrt %145 : vector<1x1xf32>
    %cst_42 = arith.constant 1.000000e+00 : f32
    %147 = vector.broadcast %cst_42 : f32 to vector<1x1xf32>
    %148 = arith.mulf %147, %146 : vector<1x1xf32>
    %c3 = arith.constant 3 : index
    %c0_43 = arith.constant 0 : index
    %149 = vector.load %arg0[%c3, %c0_43] : memref<22x256xf32, #tpu.memory_space<vmem>>, vector<1x256xf32>
    %c4 = arith.constant 4 : index
    %c0_44 = arith.constant 0 : index
    %150 = vector.load %arg0[%c4, %c0_44] : memref<22x256xf32, #tpu.memory_space<vmem>>, vector<1x256xf32>
    %151 = vector.broadcast %148 : vector<1x1xf32> to vector<1x256xf32>
    %152 = arith.mulf %151, %149 : vector<1x256xf32>
    %153 = arith.mulf %152, %149 : vector<1x256xf32>
    %154 = vector.broadcast %121 : vector<1x1xf32> to vector<1x256xf32>
    %155 = arith.addf %154, %153 : vector<1x256xf32>
    %cst_45 = arith.constant 1.000000e+00 : f32
    %156 = vector.broadcast %cst_45 : f32 to vector<1x256xf32>
    %157 = arith.subf %149, %156 : vector<1x256xf32>
    %158 = arith.mulf %157, %157 : vector<1x256xf32>
    %cst_46 = arith.constant 100.9375 : f32
    %159 = vector.broadcast %cst_46 : f32 to vector<1x256xf32>
    %160 = arith.mulf %159, %158 : vector<1x256xf32>
    %161 = arith.addf %155, %160 : vector<1x256xf32>
    %162 = arith.mulf %161, %150 : vector<1x256xf32>
    %163 = arith.mulf %142, %142 : vector<1x1xf32>
    %cst_47 = arith.constant 2.500000e-01 : f32
    %164 = vector.broadcast %cst_47 : f32 to vector<1x1xf32>
    %165 = arith.mulf %164, %163 : vector<1x1xf32>
    %166 = vector.broadcast %165 : vector<1x1xf32> to vector<1x256xf32>
    %167 = arith.addf %162, %166 : vector<1x256xf32>
    %168 = vector.shape_cast %167 : vector<1x256xf32> to vector<1x1x256xf32>
    %cst_48 = arith.constant dense<0.000000e+00> : vector<1xf32>
    %169 = vector.multi_reduction <add>, %168, %cst_48 [1, 2] : vector<1x1x256xf32> to vector<1xf32>
    %170 = vector.shape_cast %169 : vector<1xf32> to vector<1x1x1xf32>
    %171 = vector.extract %170[0, 0, 0] : f32 from vector<1x1x1xf32>
    %172 = vector.broadcast %171 : f32 to vector<1x1xf32>
    %cst_49 = arith.constant 3.906250e-03 : f32
    %173 = vector.broadcast %cst_49 : f32 to vector<1x1xf32>
    %174 = arith.mulf %172, %173 : vector<1x1xf32>
    %175 = tpu.iota {dimensions = array<i32: 1>} : vector<1x128xi32>
    %c0_i32 = arith.constant 0 : i32
    %176 = vector.broadcast %c0_i32 : i32 to vector<1x128xi32>
    %177 = arith.cmpi eq, %175, %176 : vector<1x128xi32>
    %cst_50 = arith.constant 0.000000e+00 : f32
    %178 = vector.shape_cast %174 : vector<1x1xf32> to vector<1x1xf32>
    %179 = vector.broadcast %178 : vector<1x1xf32> to vector<1x128xf32>
    %180 = vector.broadcast %cst_50 : f32 to vector<1x128xf32>
    %181 = arith.select %177, %179, %180 : vector<1x128xi1>, vector<1x128xf32>
    %c1_i32 = arith.constant 1 : i32
    %182 = vector.broadcast %c1_i32 : i32 to vector<1x128xi32>
    %183 = arith.cmpi eq, %175, %182 : vector<1x128xi32>
    %cst_51 = arith.constant 0.000000e+00 : f32
    %184 = vector.shape_cast %148 : vector<1x1xf32> to vector<1x1xf32>
    %185 = vector.broadcast %184 : vector<1x1xf32> to vector<1x128xf32>
    %186 = vector.broadcast %cst_51 : f32 to vector<1x128xf32>
    %187 = arith.select %183, %185, %186 : vector<1x128xi1>, vector<1x128xf32>
    %188 = arith.addf %181, %187 : vector<1x128xf32>
    %c2_i32 = arith.constant 2 : i32
    %189 = vector.broadcast %c2_i32 : i32 to vector<1x128xi32>
    %190 = arith.cmpi eq, %175, %189 : vector<1x128xi32>
    %cst_52 = arith.constant 0.000000e+00 : f32
    %191 = vector.shape_cast %121 : vector<1x1xf32> to vector<1x1xf32>
    %192 = vector.broadcast %191 : vector<1x1xf32> to vector<1x128xf32>
    %193 = vector.broadcast %cst_52 : f32 to vector<1x128xf32>
    %194 = arith.select %190, %192, %193 : vector<1x128xi1>, vector<1x128xf32>
    %195 = arith.addf %188, %194 : vector<1x128xf32>
    %c0_53 = arith.constant 0 : index
    %c0_54 = arith.constant 0 : index
    %196 = vector.load %arg2[%c0_53, %c0_54] : memref<1x128xf32, #tpu.memory_space<vmem>>, vector<1x128xf32>
    tpu.vector_store %arg2[%c0_53, %c0_54], %195 {strides = array<i32>} : memref<1x128xf32, #tpu.memory_space<vmem>>, vector<1x128xf32>,
    return
  }
}

</mosaic_0001>

<llo_original>
// kernel: el_loss_forward.1
$region0: #{el_loss_forward.1}
  #allocation0 [shape = 'u32[]', space=smem, size = 0x4, offset = 0x4, fixed_abs, tag = 'smem constant byte address 0x4 - core index']
  #allocation1 [shape = 'u32[144,128]{1,0:T(1,128)}', space=vmem, size = 0x12000, scoped, tag = 'internal scratch']
  %s0 = inlined_call_operand.vmem [shape: f32[22,256], index: 0, kind: input, shape index: {}]
  %s1 = inlined_call_operand.hbm [shape: f32[256,256], index: 1, kind: input, shape index: {}]
  %s2 = inlined_call_operand.vmem [shape: f32[1,128], index: 2, kind: output, shape index: {}]
  %s3 = sld [smem:[#allocation0]]
  $region22: #{el_loss_forward.1} parent=0
    _
  %s5 = ssub.s32 1, %s3
  %s6 = scalar_select 0, %s5, %s3
  $region1: #{el_loss_forward.1} parent=0
    #allocation2 [shape = 'u8[262144]{0}', space=vmem, size = 0x40000, scoped, tag = 'input window, operand 1, single buffered']
    #allocation3 [shape = 's32[1]{0}', space=sflag, size = 0x4, scoped, tag = 'scoped memory for el_loss_forward.1']
    %7 = vsyncpa [#allocation3], 0
    // Predicated region
    $region2: #{el_loss_forward.1} parent=1 // pred_check
      _
    $region3: #{el_loss_forward.1} parent=1 // pred_check_branch
      %9 = sbr.rel (0) target = $region5
    $region4: #{el_loss_forward.1} parent=1 // pred_region
      _
    $region5: #{el_loss_forward.1} parent=1 // pred_fallthru
      _
    // Predicated region
    $region6: #{el_loss_forward.1} parent=1 // pred_check
      _
    $region7: #{el_loss_forward.1} parent=1 // pred_check_branch
      %11 = sbr.rel (0) target = $region9
    $region8: #{el_loss_forward.1} parent=1 // pred_region
      %s13 = ssub.s32 8192, 8192
      %14 = vsyncadd [#allocation3], %s13
      %s15 = sshll.u32 [#allocation2], 4
      %s16 = int_to_ptr.vmem [resolvable:$true] %s15
      %21 = dma.hbm_to_vmem [thread:$0]  %s1, 8192, %s16, [#allocation3], 256, 256, 16
    $region9: #{el_loss_forward.1} parent=1 // pred_fallthru
      _
    // Predicated region
    $region10: #{el_loss_forward.1} parent=1 // pred_check
      _
    $region11: #{el_loss_forward.1} parent=1 // pred_check_branch
      %23 = sbr.rel (0) target = $region13
    $region12: #{el_loss_forward.1} parent=1 // pred_region
      %24 = dma.done [#allocation3], 8192
    $region13: #{el_loss_forward.1} parent=1 // pred_fallthru
      _
    %v25 = vld [vmem:[%s0] sm:$0xff]
    %v26 = vld [vmem:[%s0 + $0x8] sm:$0xff]
    %v27 = vlaneseq
    %v28 = vshrl.u32 %v27, 7
    %v29 = vadd.s32 %v28, 8
    %v30 = vadd.s32 %v28, 16
    %v31 = vadd.s32 %v28, 24
    %v32 = vadd.s32 %v28, 32
    %v33 = vadd.s32 %v28, 40
    %v34 = vadd.s32 %v28, 48
    %v35 = vadd.s32 %v28, 56
    %v36 = vadd.s32 %v28, 64
    %v37 = vadd.s32 %v28, 72
    %v38 = vadd.s32 %v28, 80
    %v39 = vadd.s32 %v28, 88
    %v40 = vadd.s32 %v28, 96
    %v41 = vadd.s32 %v28, 104
    %v42 = vadd.s32 %v28, 112
    %v43 = vadd.s32 %v28, 120
    %v44 = vadd.s32 %v28, 128
    %v45 = vadd.s32 %v28, 136
    %v46 = vadd.s32 %v28, 144
    %v47 = vadd.s32 %v28, 152
    %v48 = vadd.s32 %v28, 160
    %v49 = vadd.s32 %v28, 168
    %v50 = vadd.s32 %v28, 176
    %v51 = vadd.s32 %v28, 184
    %v52 = vadd.s32 %v28, 192
    %v53 = vadd.s32 %v28, 200
    %v54 = vadd.s32 %v28, 208
    %v55 = vadd.s32 %v28, 216
    %v56 = vadd.s32 %v28, 224
    %v57 = vadd.s32 %v28, 232
    %v58 = vadd.s32 %v28, 240
    %v59 = vadd.s32 %v28, 248
    %s60 = scalar_lea.vmem %s0, 21
    %v61 = vld [vmem:[%s60] ss:$8 sm:$0x3]
    %v62 = vcvt.f32.s32.to.zero.pseudo %v61
    %s63 = scalar_lea.vmem %s0, 5
    %v64 = vld [vmem:[%s63] ss:$8 sm:$0x3]
    %v65 = vlaneseq
    %v66 = vshrl.u32 %v65, 7
    %v67 = vsub.s32 0, %v66
    %v68 = vrot.slane %v62, %v67
    %v69 = vlaneseq
    %v70 = vshrl.u32 %v69, 7
    %v71 = vsub.s32 1, %v70
    %v72 = vrot.slane %v62, %v71
    %vm73 = vcmp.eq.s32.totalorder %v28, %v68
    %vm74 = vcmp.eq.s32.totalorder %v28, %v72
    %vm75 = vcmp.eq.s32.totalorder %v29, %v68
    %vm76 = vcmp.eq.s32.totalorder %v29, %v72
    %vm77 = vcmp.eq.s32.totalorder %v30, %v68
    %vm78 = vcmp.eq.s32.totalorder %v30, %v72
    %vm79 = vcmp.eq.s32.totalorder %v31, %v68
    %vm80 = vcmp.eq.s32.totalorder %v31, %v72
    %vm81 = vcmp.eq.s32.totalorder %v32, %v68
    %vm82 = vcmp.eq.s32.totalorder %v32, %v72
    %vm83 = vcmp.eq.s32.totalorder %v33, %v68
    %vm84 = vcmp.eq.s32.totalorder %v33, %v72
    %vm85 = vcmp.eq.s32.totalorder %v34, %v68
    %vm86 = vcmp.eq.s32.totalorder %v34, %v72
    %vm87 = vcmp.eq.s32.totalorder %v35, %v68
    %vm88 = vcmp.eq.s32.totalorder %v35, %v72
    %vm89 = vcmp.eq.s32.totalorder %v36, %v68
    %vm90 = vcmp.eq.s32.totalorder %v36, %v72
    %vm91 = vcmp.eq.s32.totalorder %v37, %v68
    %vm92 = vcmp.eq.s32.totalorder %v37, %v72
    %vm93 = vcmp.eq.s32.totalorder %v38, %v68
    %vm94 = vcmp.eq.s32.totalorder %v38, %v72
    %vm95 = vcmp.eq.s32.totalorder %v39, %v68
    %vm96 = vcmp.eq.s32.totalorder %v39, %v72
    %vm97 = vcmp.eq.s32.totalorder %v40, %v68
    %vm98 = vcmp.eq.s32.totalorder %v40, %v72
    %vm99 = vcmp.eq.s32.totalorder %v41, %v68
    %vm100 = vcmp.eq.s32.totalorder %v41, %v72
    %vm101 = vcmp.eq.s32.totalorder %v42, %v68
    %vm102 = vcmp.eq.s32.totalorder %v42, %v72
    %vm103 = vcmp.eq.s32.totalorder %v43, %v68
    %vm104 = vcmp.eq.s32.totalorder %v43, %v72
    %vm105 = vcmp.eq.s32.totalorder %v44, %v68
    %vm106 = vcmp.eq.s32.totalorder %v44, %v72
    %vm107 = vcmp.eq.s32.totalorder %v45, %v68
    %vm108 = vcmp.eq.s32.totalorder %v45, %v72
    %vm109 = vcmp.eq.s32.totalorder %v46, %v68
    %vm110 = vcmp.eq.s32.totalorder %v46, %v72
    %vm111 = vcmp.eq.s32.totalorder %v47, %v68
    %vm112 = vcmp.eq.s32.totalorder %v47, %v72
    %vm113 = vcmp.eq.s32.totalorder %v48, %v68
    %vm114 = vcmp.eq.s32.totalorder %v48, %v72
    %vm115 = vcmp.eq.s32.totalorder %v49, %v68
    %vm116 = vcmp.eq.s32.totalorder %v49, %v72
    %vm117 = vcmp.eq.s32.totalorder %v50, %v68
    %vm118 = vcmp.eq.s32.totalorder %v50, %v72
    %vm119 = vcmp.eq.s32.totalorder %v51, %v68
    %vm120 = vcmp.eq.s32.totalorder %v51, %v72
    %vm121 = vcmp.eq.s32.totalorder %v52, %v68
    %vm122 = vcmp.eq.s32.totalorder %v52, %v72
    %vm123 = vcmp.eq.s32.totalorder %v53, %v68
    %vm124 = vcmp.eq.s32.totalorder %v53, %v72
    %vm125 = vcmp.eq.s32.totalorder %v54, %v68
    %vm126 = vcmp.eq.s32.totalorder %v54, %v72
    %vm127 = vcmp.eq.s32.totalorder %v55, %v68
    %vm128 = vcmp.eq.s32.totalorder %v55, %v72
    %vm129 = vcmp.eq.s32.totalorder %v56, %v68
    %vm130 = vcmp.eq.s32.totalorder %v56, %v72
    %vm131 = vcmp.eq.s32.totalorder %v57, %v68
    %vm132 = vcmp.eq.s32.totalorder %v57, %v72
    %vm133 = vcmp.eq.s32.totalorder %v58, %v68
    %vm134 = vcmp.eq.s32.totalorder %v58, %v72
    %vm135 = vcmp.eq.s32.totalorder %v59, %v68
    %vm136 = vcmp.eq.s32.totalorder %v59, %v72
    %v138 = vlaneseq
    %v139 = vshrl.u32 %v138, 7
    %v140 = vsub.s32 0, %v139
    %v141 = vrot.slane %v64, %v140
    %v142 = vlaneseq
    %v143 = vshrl.u32 %v142, 7
    %v144 = vsub.s32 1, %v143
    %v145 = vrot.slane %v64, %v144
    %v148 = vsel %vm73, %v141, 0.0
    %v149 = vsel %vm74, %v145, 0.0
    %v150 = vsel %vm75, %v141, 0.0
    %v151 = vsel %vm76, %v145, 0.0
    %v152 = vsel %vm77, %v141, 0.0
    %v153 = vsel %vm78, %v145, 0.0
    %v154 = vsel %vm79, %v141, 0.0
    %v155 = vsel %vm80, %v145, 0.0
    %v156 = vsel %vm81, %v141, 0.0
    %v157 = vsel %vm82, %v145, 0.0
    %v158 = vsel %vm83, %v141, 0.0
    %v159 = vsel %vm84, %v145, 0.0
    %v160 = vsel %vm85, %v141, 0.0
    %v161 = vsel %vm86, %v145, 0.0
    %v162 = vsel %vm87, %v141, 0.0
    %v163 = vsel %vm88, %v145, 0.0
    %v164 = vsel %vm89, %v141, 0.0
    %v165 = vsel %vm90, %v145, 0.0
    %v166 = vsel %vm91, %v141, 0.0
    %v167 = vsel %vm92, %v145, 0.0
    %v168 = vsel %vm93, %v141, 0.0
    %v169 = vsel %vm94, %v145, 0.0
    %v170 = vsel %vm95, %v141, 0.0
    %v171 = vsel %vm96, %v145, 0.0
    %v172 = vsel %vm97, %v141, 0.0
    %v173 = vsel %vm98, %v145, 0.0
    %v174 = vsel %vm99, %v141, 0.0
    %v175 = vsel %vm100, %v145, 0.0
    %v176 = vsel %vm101, %v141, 0.0
    %v177 = vsel %vm102, %v145, 0.0
    %v178 = vsel %vm103, %v141, 0.0
    %v179 = vsel %vm104, %v145, 0.0
    %v180 = vsel %vm105, %v141, 0.0
    %v181 = vsel %vm106, %v145, 0.0
    %v182 = vsel %vm107, %v141, 0.0
    %v183 = vsel %vm108, %v145, 0.0
    %v184 = vsel %vm109, %v141, 0.0
    %v185 = vsel %vm110, %v145, 0.0
    %v186 = vsel %vm111, %v141, 0.0
    %v187 = vsel %vm112, %v145, 0.0
    %v188 = vsel %vm113, %v141, 0.0
    %v189 = vsel %vm114, %v145, 0.0
    %v190 = vsel %vm115, %v141, 0.0
    %v191 = vsel %vm116, %v145, 0.0
    %v192 = vsel %vm117, %v141, 0.0
    %v193 = vsel %vm118, %v145, 0.0
    %v194 = vsel %vm119, %v141, 0.0
    %v195 = vsel %vm120, %v145, 0.0
    %v196 = vsel %vm121, %v141, 0.0
    %v197 = vsel %vm122, %v145, 0.0
    %v198 = vsel %vm123, %v141, 0.0
    %v199 = vsel %vm124, %v145, 0.0
    %v200 = vsel %vm125, %v141, 0.0
    %v201 = vsel %vm126, %v145, 0.0
    %v202 = vsel %vm127, %v141, 0.0
    %v203 = vsel %vm128, %v145, 0.0
    %v204 = vsel %vm129, %v141, 0.0
    %v205 = vsel %vm130, %v145, 0.0
    %v206 = vsel %vm131, %v141, 0.0
    %v207 = vsel %vm132, %v145, 0.0
    %v208 = vsel %vm133, %v141, 0.0
    %v209 = vsel %vm134, %v145, 0.0
    %v210 = vsel %vm135, %v141, 0.0
    %v211 = vsel %vm136, %v145, 0.0
    %s212 = scalar_lea.vmem %s0, 22
    %v213 = vld [vmem:[%s212] ss:$8 sm:$0x3]
    %v214 = vcvt.f32.s32.to.zero.pseudo %v213
    %s215 = scalar_lea.vmem %s0, 6
    %v216 = vld [vmem:[%s215] ss:$8 sm:$0x3]
    %v217 = vlaneseq
    %v218 = vshrl.u32 %v217, 7
    %v219 = vsub.s32 0, %v218
    %v220 = vrot.slane %v214, %v219
    %v221 = vlaneseq
    %v222 = vshrl.u32 %v221, 7
    %v223 = vsub.s32 1, %v222
    %v224 = vrot.slane %v214, %v223
    %vm225 = vcmp.eq.s32.totalorder %v28, %v220
    %vm226 = vcmp.eq.s32.totalorder %v28, %v224
    %vm227 = vcmp.eq.s32.totalorder %v29, %v220
    %vm228 = vcmp.eq.s32.totalorder %v29, %v224
    %vm229 = vcmp.eq.s32.totalorder %v30, %v220
    %vm230 = vcmp.eq.s32.totalorder %v30, %v224
    %vm231 = vcmp.eq.s32.totalorder %v31, %v220
    %vm232 = vcmp.eq.s32.totalorder %v31, %v224
    %vm233 = vcmp.eq.s32.totalorder %v32, %v220
    %vm234 = vcmp.eq.s32.totalorder %v32, %v224
    %vm235 = vcmp.eq.s32.totalorder %v33, %v220
    %vm236 = vcmp.eq.s32.totalorder %v33, %v224
    %vm237 = vcmp.eq.s32.totalorder %v34, %v220
    %vm238 = vcmp.eq.s32.totalorder %v34, %v224
    %vm239 = vcmp.eq.s32.totalorder %v35, %v220
    %vm240 = vcmp.eq.s32.totalorder %v35, %v224
    %vm241 = vcmp.eq.s32.totalorder %v36, %v220
    %vm242 = vcmp.eq.s32.totalorder %v36, %v224
    %vm243 = vcmp.eq.s32.totalorder %v37, %v220
    %vm244 = vcmp.eq.s32.totalorder %v37, %v224
    %vm245 = vcmp.eq.s32.totalorder %v38, %v220
    %vm246 = vcmp.eq.s32.totalorder %v38, %v224
    %vm247 = vcmp.eq.s32.totalorder %v39, %v220
    %vm248 = vcmp.eq.s32.totalorder %v39, %v224
    %vm249 = vcmp.eq.s32.totalorder %v40, %v220
    %vm250 = vcmp.eq.s32.totalorder %v40, %v224
    %vm251 = vcmp.eq.s32.totalorder %v41, %v220
    %vm252 = vcmp.eq.s32.totalorder %v41, %v224
    %vm253 = vcmp.eq.s32.totalorder %v42, %v220
    %vm254 = vcmp.eq.s32.totalorder %v42, %v224
    %vm255 = vcmp.eq.s32.totalorder %v43, %v220
    %vm256 = vcmp.eq.s32.totalorder %v43, %v224
    %vm257 = vcmp.eq.s32.totalorder %v44, %v220
    %vm258 = vcmp.eq.s32.totalorder %v44, %v224
    %vm259 = vcmp.eq.s32.totalorder %v45, %v220
    %vm260 = vcmp.eq.s32.totalorder %v45, %v224
    %vm261 = vcmp.eq.s32.totalorder %v46, %v220
    %vm262 = vcmp.eq.s32.totalorder %v46, %v224
    %vm263 = vcmp.eq.s32.totalorder %v47, %v220
    %vm264 = vcmp.eq.s32.totalorder %v47, %v224
    %vm265 = vcmp.eq.s32.totalorder %v48, %v220
    %vm266 = vcmp.eq.s32.totalorder %v48, %v224
    %vm267 = vcmp.eq.s32.totalorder %v49, %v220
    %vm268 = vcmp.eq.s32.totalorder %v49, %v224
    %vm269 = vcmp.eq.s32.totalorder %v50, %v220
    %vm270 = vcmp.eq.s32.totalorder %v50, %v224
    %vm271 = vcmp.eq.s32.totalorder %v51, %v220
    %vm272 = vcmp.eq.s32.totalorder %v51, %v224
    %vm273 = vcmp.eq.s32.totalorder %v52, %v220
    %vm274 = vcmp.eq.s32.totalorder %v52, %v224
    %vm275 = vcmp.eq.s32.totalorder %v53, %v220
    %vm276 = vcmp.eq.s32.totalorder %v53, %v224
    %vm277 = vcmp.eq.s32.totalorder %v54, %v220
    %vm278 = vcmp.eq.s32.totalorder %v54, %v224
    %vm279 = vcmp.eq.s32.totalorder %v55, %v220
    %vm280 = vcmp.eq.s32.totalorder %v55, %v224
    %vm281 = vcmp.eq.s32.totalorder %v56, %v220
    %vm282 = vcmp.eq.s32.totalorder %v56, %v224
    %vm283 = vcmp.eq.s32.totalorder %v57, %v220
    %vm284 = vcmp.eq.s32.totalorder %v57, %v224
    %vm285 = vcmp.eq.s32.totalorder %v58, %v220
    %vm286 = vcmp.eq.s32.totalorder %v58, %v224
    %vm287 = vcmp.eq.s32.totalorder %v59, %v220
    %vm288 = vcmp.eq.s32.totalorder %v59, %v224
    %v290 = vlaneseq
    %v291 = vshrl.u32 %v290, 7
    %v292 = vsub.s32 0, %v291
    %v293 = vrot.slane %v216, %v292
    %v294 = vlaneseq
    %v295 = vshrl.u32 %v294, 7
    %v296 = vsub.s32 1, %v295
    %v297 = vrot.slane %v216, %v296
    %v300 = vsel %vm225, %v293, 0.0
    %v301 = vsel %vm226, %v297, 0.0
    %v302 = vsel %vm227, %v293, 0.0
    %v303 = vsel %vm228, %v297, 0.0
    %v304 = vsel %vm229, %v293, 0.0
    %v305 = vsel %vm230, %v297, 0.0
    %v306 = vsel %vm231, %v293, 0.0
    %v307 = vsel %vm232, %v297, 0.0
    %v308 = vsel %vm233, %v293, 0.0
    %v309 = vsel %vm234, %v297, 0.0
    %v310 = vsel %vm235, %v293, 0.0
    %v311 = vsel %vm236, %v297, 0.0
    %v312 = vsel %vm237, %v293, 0.0
    %v313 = vsel %vm238, %v297, 0.0
    %v314 = vsel %vm239, %v293, 0.0
    %v315 = vsel %vm240, %v297, 0.0
    %v316 = vsel %vm241, %v293, 0.0
    %v317 = vsel %vm242, %v297, 0.0
    %v318 = vsel %vm243, %v293, 0.0
    %v319 = vsel %vm244, %v297, 0.0
    %v320 = vsel %vm245, %v293, 0.0
    %v321 = vsel %vm246, %v297, 0.0
    %v322 = vsel %vm247, %v293, 0.0
    %v323 = vsel %vm248, %v297, 0.0
    %v324 = vsel %vm249, %v293, 0.0
    %v325 = vsel %vm250, %v297, 0.0
    %v326 = vsel %vm251, %v293, 0.0
    %v327 = vsel %vm252, %v297, 0.0
    %v328 = vsel %vm253, %v293, 0.0
    %v329 = vsel %vm254, %v297, 0.0
    %v330 = vsel %vm255, %v293, 0.0
    %v331 = vsel %vm256, %v297, 0.0
    %v332 = vsel %vm257, %v293, 0.0
    %v333 = vsel %vm258, %v297, 0.0
    %v334 = vsel %vm259, %v293, 0.0
    %v335 = vsel %vm260, %v297, 0.0
    %v336 = vsel %vm261, %v293, 0.0
    %v337 = vsel %vm262, %v297, 0.0
    %v338 = vsel %vm263, %v293, 0.0
    %v339 = vsel %vm264, %v297, 0.0
    %v340 = vsel %vm265, %v293, 0.0
    %v341 = vsel %vm266, %v297, 0.0
    %v342 = vsel %vm267, %v293, 0.0
    %v343 = vsel %vm268, %v297, 0.0
    %v344 = vsel %vm269, %v293, 0.0
    %v345 = vsel %vm270, %v297, 0.0
    %v346 = vsel %vm271, %v293, 0.0
    %v347 = vsel %vm272, %v297, 0.0
    %v348 = vsel %vm273, %v293, 0.0
    %v349 = vsel %vm274, %v297, 0.0
    %v350 = vsel %vm275, %v293, 0.0
    %v351 = vsel %vm276, %v297, 0.0
    %v352 = vsel %vm277, %v293, 0.0
    %v353 = vsel %vm278, %v297, 0.0
    %v354 = vsel %vm279, %v293, 0.0
    %v355 = vsel %vm280, %v297, 0.0
    %v356 = vsel %vm281, %v293, 0.0
    %v357 = vsel %vm282, %v297, 0.0
    %v358 = vsel %vm283, %v293, 0.0
    %v359 = vsel %vm284, %v297, 0.0
    %v360 = vsel %vm285, %v293, 0.0
    %v361 = vsel %vm286, %v297, 0.0
    %v362 = vsel %vm287, %v293, 0.0
    %v363 = vsel %vm288, %v297, 0.0
    %v364 = vadd.f32 %v148, %v300
    %v365 = vadd.f32 %v149, %v301
    %v366 = vadd.f32 %v150, %v302
    %v367 = vadd.f32 %v151, %v303
    %v368 = vadd.f32 %v152, %v304
    %v369 = vadd.f32 %v153, %v305
    %v370 = vadd.f32 %v154, %v306
    %v371 = vadd.f32 %v155, %v307
    %v372 = vadd.f32 %v156, %v308
    %v373 = vadd.f32 %v157, %v309
    %v374 = vadd.f32 %v158, %v310
    %v375 = vadd.f32 %v159, %v311
    %v376 = vadd.f32 %v160, %v312
    %v377 = vadd.f32 %v161, %v313
    %v378 = vadd.f32 %v162, %v314
    %v379 = vadd.f32 %v163, %v315
    %v380 = vadd.f32 %v164, %v316
    %v381 = vadd.f32 %v165, %v317
    %v382 = vadd.f32 %v166, %v318
    %v383 = vadd.f32 %v167, %v319
    %v384 = vadd.f32 %v168, %v320
    %v385 = vadd.f32 %v169, %v321
    %v386 = vadd.f32 %v170, %v322
    %v387 = vadd.f32 %v171, %v323
    %v388 = vadd.f32 %v172, %v324
    %v389 = vadd.f32 %v173, %v325
    %v390 = vadd.f32 %v174, %v326
    %v391 = vadd.f32 %v175, %v327
    %v392 = vadd.f32 %v176, %v328
    %v393 = vadd.f32 %v177, %v329
    %v394 = vadd.f32 %v178, %v330
    %v395 = vadd.f32 %v179, %v331
    %v396 = vadd.f32 %v180, %v332
    %v397 = vadd.f32 %v181, %v333
    %v398 = vadd.f32 %v182, %v334
    %v399 = vadd.f32 %v183, %v335
    %v400 = vadd.f32 %v184, %v336
    %v401 = vadd.f32 %v185, %v337
    %v402 = vadd.f32 %v186, %v338
    %v403 = vadd.f32 %v187, %v339
    %v404 = vadd.f32 %v188, %v340
    %v405 = vadd.f32 %v189, %v341
    %v406 = vadd.f32 %v190, %v342
    %v407 = vadd.f32 %v191, %v343
    %v408 = vadd.f32 %v192, %v344
    %v409 = vadd.f32 %v193, %v345
    %v410 = vadd.f32 %v194, %v346
    %v411 = vadd.f32 %v195, %v347
    %v412 = vadd.f32 %v196, %v348
    %v413 = vadd.f32 %v197, %v349
    %v414 = vadd.f32 %v198, %v350
    %v415 = vadd.f32 %v199, %v351
    %v416 = vadd.f32 %v200, %v352
    %v417 = vadd.f32 %v201, %v353
    %v418 = vadd.f32 %v202, %v354
    %v419 = vadd.f32 %v203, %v355
    %v420 = vadd.f32 %v204, %v356
    %v421 = vadd.f32 %v205, %v357
    %v422 = vadd.f32 %v206, %v358
    %v423 = vadd.f32 %v207, %v359
    %v424 = vadd.f32 %v208, %v360
    %v425 = vadd.f32 %v209, %v361
    %v426 = vadd.f32 %v210, %v362
    %v427 = vadd.f32 %v211, %v363
    %s428 = scalar_lea.vmem %s0, 23
    %v429 = vld [vmem:[%s428] ss:$8 sm:$0x3]
    %v430 = vcvt.f32.s32.to.zero.pseudo %v429
    %s431 = scalar_lea.vmem %s0, 7
    %v432 = vld [vmem:[%s431] ss:$8 sm:$0x3]
    %v433 = vlaneseq
    %v434 = vshrl.u32 %v433, 7
    %v435 = vsub.s32 0, %v434
    %v436 = vrot.slane %v430, %v435
    %v437 = vlaneseq
    %v438 = vshrl.u32 %v437, 7
    %v439 = vsub.s32 1, %v438
    %v440 = vrot.slane %v430, %v439
    %vm441 = vcmp.eq.s32.totalorder %v28, %v436
    %vm442 = vcmp.eq.s32.totalorder %v28, %v440
    %vm443 = vcmp.eq.s32.totalorder %v29, %v436
    %vm444 = vcmp.eq.s32.totalorder %v29, %v440
    %vm445 = vcmp.eq.s32.totalorder %v30, %v436
    %vm446 = vcmp.eq.s32.totalorder %v30, %v440
    %vm447 = vcmp.eq.s32.totalorder %v31, %v436
    %vm448 = vcmp.eq.s32.totalorder %v31, %v440
    %vm449 = vcmp.eq.s32.totalorder %v32, %v436
    %vm450 = vcmp.eq.s32.totalorder %v32, %v440
    %vm451 = vcmp.eq.s32.totalorder %v33, %v436
    %vm452 = vcmp.eq.s32.totalorder %v33, %v440
    %vm453 = vcmp.eq.s32.totalorder %v34, %v436
    %vm454 = vcmp.eq.s32.totalorder %v34, %v440
    %vm455 = vcmp.eq.s32.totalorder %v35, %v436
    %vm456 = vcmp.eq.s32.totalorder %v35, %v440
    %vm457 = vcmp.eq.s32.totalorder %v36, %v436
    %vm458 = vcmp.eq.s32.totalorder %v36, %v440
    %vm459 = vcmp.eq.s32.totalorder %v37, %v436
    %vm460 = vcmp.eq.s32.totalorder %v37, %v440
    %vm461 = vcmp.eq.s32.totalorder %v38, %v436
    %vm462 = vcmp.eq.s32.totalorder %v38, %v440
    %vm463 = vcmp.eq.s32.totalorder %v39, %v436
    %vm464 = vcmp.eq.s32.totalorder %v39, %v440
    %vm465 = vcmp.eq.s32.totalorder %v40, %v436
    %vm466 = vcmp.eq.s32.totalorder %v40, %v440
    %vm467 = vcmp.eq.s32.totalorder %v41, %v436
    %vm468 = vcmp.eq.s32.totalorder %v41, %v440
    %vm469 = vcmp.eq.s32.totalorder %v42, %v436
    %vm470 = vcmp.eq.s32.totalorder %v42, %v440
    %vm471 = vcmp.eq.s32.totalorder %v43, %v436
    %vm472 = vcmp.eq.s32.totalorder %v43, %v440
    %vm473 = vcmp.eq.s32.totalorder %v44, %v436
    %vm474 = vcmp.eq.s32.totalorder %v44, %v440
    %vm475 = vcmp.eq.s32.totalorder %v45, %v436
    %vm476 = vcmp.eq.s32.totalorder %v45, %v440
    %vm477 = vcmp.eq.s32.totalorder %v46, %v436
    %vm478 = vcmp.eq.s32.totalorder %v46, %v440
    %vm479 = vcmp.eq.s32.totalorder %v47, %v436
    %vm480 = vcmp.eq.s32.totalorder %v47, %v440
    %vm481 = vcmp.eq.s32.totalorder %v48, %v436
    %vm482 = vcmp.eq.s32.totalorder %v48, %v440
    %vm483 = vcmp.eq.s32.totalorder %v49, %v436
    %vm484 = vcmp.eq.s32.totalorder %v49, %v440
    %vm485 = vcmp.eq.s32.totalorder %v50, %v436
    %vm486 = vcmp.eq.s32.totalorder %v50, %v440
    %vm487 = vcmp.eq.s32.totalorder %v51, %v436
    %vm488 = vcmp.eq.s32.totalorder %v51, %v440
    %vm489 = vcmp.eq.s32.totalorder %v52, %v436
    %vm490 = vcmp.eq.s32.totalorder %v52, %v440
    %vm491 = vcmp.eq.s32.totalorder %v53, %v436
    %vm492 = vcmp.eq.s32.totalorder %v53, %v440
    %vm493 = vcmp.eq.s32.totalorder %v54, %v436
    %vm494 = vcmp.eq.s32.totalorder %v54, %v440
    %vm495 = vcmp.eq.s32.totalorder %v55, %v436
    %vm496 = vcmp.eq.s32.totalorder %v55, %v440
    %vm497 = vcmp.eq.s32.totalorder %v56, %v436
    %vm498 = vcmp.eq.s32.totalorder %v56, %v440
    %vm499 = vcmp.eq.s32.totalorder %v57, %v436
    %vm500 = vcmp.eq.s32.totalorder %v57, %v440
    %vm501 = vcmp.eq.s32.totalorder %v58, %v436
    %vm502 = vcmp.eq.s32.totalorder %v58, %v440
    %vm503 = vcmp.eq.s32.totalorder %v59, %v436
    %vm504 = vcmp.eq.s32.totalorder %v59, %v440
    %v506 = vlaneseq
    %v507 = vshrl.u32 %v506, 7
    %v508 = vsub.s32 0, %v507
    %v509 = vrot.slane %v432, %v508
    %v510 = vlaneseq
    %v511 = vshrl.u32 %v510, 7
    %v512 = vsub.s32 1, %v511
    %v513 = vrot.slane %v432, %v512
    %v516 = vsel %vm441, %v509, 0.0
    %v517 = vsel %vm442, %v513, 0.0
    %v518 = vsel %vm443, %v509, 0.0
    %v519 = vsel %vm444, %v513, 0.0
    %v520 = vsel %vm445, %v509, 0.0
    %v521 = vsel %vm446, %v513, 0.0
    %v522 = vsel %vm447, %v509, 0.0
    %v523 = vsel %vm448, %v513, 0.0
    %v524 = vsel %vm449, %v509, 0.0
    %v525 = vsel %vm450, %v513, 0.0
    %v526 = vsel %vm451, %v509, 0.0
    %v527 = vsel %vm452, %v513, 0.0
    %v528 = vsel %vm453, %v509, 0.0
    %v529 = vsel %vm454, %v513, 0.0
    %v530 = vsel %vm455, %v509, 0.0
    %v531 = vsel %vm456, %v513, 0.0
    %v532 = vsel %vm457, %v509, 0.0
    %v533 = vsel %vm458, %v513, 0.0
    %v534 = vsel %vm459, %v509, 0.0
    %v535 = vsel %vm460, %v513, 0.0
    %v536 = vsel %vm461, %v509, 0.0
    %v537 = vsel %vm462, %v513, 0.0
    %v538 = vsel %vm463, %v509, 0.0
    %v539 = vsel %vm464, %v513, 0.0
    %v540 = vsel %vm465, %v509, 0.0
    %v541 = vsel %vm466, %v513, 0.0
    %v542 = vsel %vm467, %v509, 0.0
    %v543 = vsel %vm468, %v513, 0.0
    %v544 = vsel %vm469, %v509, 0.0
    %v545 = vsel %vm470, %v513, 0.0
    %v546 = vsel %vm471, %v509, 0.0
    %v547 = vsel %vm472, %v513, 0.0
    %v548 = vsel %vm473, %v509, 0.0
    %v549 = vsel %vm474, %v513, 0.0
    %v550 = vsel %vm475, %v509, 0.0
    %v551 = vsel %vm476, %v513, 0.0
    %v552 = vsel %vm477, %v509, 0.0
    %v553 = vsel %vm478, %v513, 0.0
    %v554 = vsel %vm479, %v509, 0.0
    %v555 = vsel %vm480, %v513, 0.0
    %v556 = vsel %vm481, %v509, 0.0
    %v557 = vsel %vm482, %v513, 0.0
    %v558 = vsel %vm483, %v509, 0.0
    %v559 = vsel %vm484, %v513, 0.0
    %v560 = vsel %vm485, %v509, 0.0
    %v561 = vsel %vm486, %v513, 0.0
    %v562 = vsel %vm487, %v509, 0.0
    %v563 = vsel %vm488, %v513, 0.0
    %v564 = vsel %vm489, %v509, 0.0
    %v565 = vsel %vm490, %v513, 0.0
    %v566 = vsel %vm491, %v509, 0.0
    %v567 = vsel %vm492, %v513, 0.0
    %v568 = vsel %vm493, %v509, 0.0
    %v569 = vsel %vm494, %v513, 0.0
    %v570 = vsel %vm495, %v509, 0.0
    %v571 = vsel %vm496, %v513, 0.0
    %v572 = vsel %vm497, %v509, 0.0
    %v573 = vsel %vm498, %v513, 0.0
    %v574 = vsel %vm499, %v509, 0.0
    %v575 = vsel %vm500, %v513, 0.0
    %v576 = vsel %vm501, %v509, 0.0
    %v577 = vsel %vm502, %v513, 0.0
    %v578 = vsel %vm503, %v509, 0.0
    %v579 = vsel %vm504, %v513, 0.0
    %v580 = vadd.f32 %v364, %v516
    %v581 = vadd.f32 %v365, %v517
    %v582 = vadd.f32 %v366, %v518
    %v583 = vadd.f32 %v367, %v519
    %v584 = vadd.f32 %v368, %v520
    %v585 = vadd.f32 %v369, %v521
    %v586 = vadd.f32 %v370, %v522
    %v587 = vadd.f32 %v371, %v523
    %v588 = vadd.f32 %v372, %v524
    %v589 = vadd.f32 %v373, %v525
    %v590 = vadd.f32 %v374, %v526
    %v591 = vadd.f32 %v375, %v527
    %v592 = vadd.f32 %v376, %v528
    %v593 = vadd.f32 %v377, %v529
    %v594 = vadd.f32 %v378, %v530
    %v595 = vadd.f32 %v379, %v531
    %v596 = vadd.f32 %v380, %v532
    %v597 = vadd.f32 %v381, %v533
    %v598 = vadd.f32 %v382, %v534
    %v599 = vadd.f32 %v383, %v535
    %v600 = vadd.f32 %v384, %v536
    %v601 = vadd.f32 %v385, %v537
    %v602 = vadd.f32 %v386, %v538
    %v603 = vadd.f32 %v387, %v539
    %v604 = vadd.f32 %v388, %v540
    %v605 = vadd.f32 %v389, %v541
    %v606 = vadd.f32 %v390, %v542
    %v607 = vadd.f32 %v391, %v543
    %v608 = vadd.f32 %v392, %v544
    %v609 = vadd.f32 %v393, %v545
    %v610 = vadd.f32 %v394, %v546
    %v611 = vadd.f32 %v395, %v547
    %v612 = vadd.f32 %v396, %v548
    %v613 = vadd.f32 %v397, %v549
    %v614 = vadd.f32 %v398, %v550
    %v615 = vadd.f32 %v399, %v551
    %v616 = vadd.f32 %v400, %v552
    %v617 = vadd.f32 %v401, %v553
    %v618 = vadd.f32 %v402, %v554
    %v619 = vadd.f32 %v403, %v555
    %v620 = vadd.f32 %v404, %v556
    %v621 = vadd.f32 %v405, %v557
    %v622 = vadd.f32 %v406, %v558
    %v623 = vadd.f32 %v407, %v559
    %v624 = vadd.f32 %v408, %v560
    %v625 = vadd.f32 %v409, %v561
    %v626 = vadd.f32 %v410, %v562
    %v627 = vadd.f32 %v411, %v563
    %v628 = vadd.f32 %v412, %v564
    %v629 = vadd.f32 %v413, %v565
    %v630 = vadd.f32 %v414, %v566
    %v631 = vadd.f32 %v415, %v567
    %v632 = vadd.f32 %v416, %v568
    %v633 = vadd.f32 %v417, %v569
    %v634 = vadd.f32 %v418, %v570
    %v635 = vadd.f32 %v419, %v571
    %v636 = vadd.f32 %v420, %v572
    %v637 = vadd.f32 %v421, %v573
    %v638 = vadd.f32 %v422, %v574
    %v639 = vadd.f32 %v423, %v575
    %v640 = vadd.f32 %v424, %v576
    %v641 = vadd.f32 %v425, %v577
    %v642 = vadd.f32 %v426, %v578
    %v643 = vadd.f32 %v427, %v579
    %s644 = scalar_lea.vmem %s0, 32
    %v645 = vld [vmem:[%s644] ss:$8 sm:$0x3]
    %v646 = vcvt.f32.s32.to.zero.pseudo %v645
    %s647 = scalar_lea.vmem %s0, 16
    %v648 = vld [vmem:[%s647] ss:$8 sm:$0x3]
    %v649 = vlaneseq
    %v650 = vshrl.u32 %v649, 7
    %v651 = vsub.s32 0, %v650
    %v652 = vrot.slane %v646, %v651
    %v653 = vlaneseq
    %v654 = vshrl.u32 %v653, 7
    %v655 = vsub.s32 1, %v654
    %v656 = vrot.slane %v646, %v655
    %vm657 = vcmp.eq.s32.totalorder %v28, %v652
    %vm658 = vcmp.eq.s32.totalorder %v28, %v656
    %vm659 = vcmp.eq.s32.totalorder %v29, %v652
    %vm660 = vcmp.eq.s32.totalorder %v29, %v656
    %vm661 = vcmp.eq.s32.totalorder %v30, %v652
    %vm662 = vcmp.eq.s32.totalorder %v30, %v656
    %vm663 = vcmp.eq.s32.totalorder %v31, %v652
    %vm664 = vcmp.eq.s32.totalorder %v31, %v656
    %vm665 = vcmp.eq.s32.totalorder %v32, %v652
    %vm666 = vcmp.eq.s32.totalorder %v32, %v656
    %vm667 = vcmp.eq.s32.totalorder %v33, %v652
    %vm668 = vcmp.eq.s32.totalorder %v33, %v656
    %vm669 = vcmp.eq.s32.totalorder %v34, %v652
    %vm670 = vcmp.eq.s32.totalorder %v34, %v656
    %vm671 = vcmp.eq.s32.totalorder %v35, %v652
    %vm672 = vcmp.eq.s32.totalorder %v35, %v656
    %vm673 = vcmp.eq.s32.totalorder %v36, %v652
    %vm674 = vcmp.eq.s32.totalorder %v36, %v656
    %vm675 = vcmp.eq.s32.totalorder %v37, %v652
    %vm676 = vcmp.eq.s32.totalorder %v37, %v656
    %vm677 = vcmp.eq.s32.totalorder %v38, %v652
    %vm678 = vcmp.eq.s32.totalorder %v38, %v656
    %vm679 = vcmp.eq.s32.totalorder %v39, %v652
    %vm680 = vcmp.eq.s32.totalorder %v39, %v656
    %vm681 = vcmp.eq.s32.totalorder %v40, %v652
    %vm682 = vcmp.eq.s32.totalorder %v40, %v656
    %vm683 = vcmp.eq.s32.totalorder %v41, %v652
    %vm684 = vcmp.eq.s32.totalorder %v41, %v656
    %vm685 = vcmp.eq.s32.totalorder %v42, %v652
    %vm686 = vcmp.eq.s32.totalorder %v42, %v656
    %vm687 = vcmp.eq.s32.totalorder %v43, %v652
    %vm688 = vcmp.eq.s32.totalorder %v43, %v656
    %vm689 = vcmp.eq.s32.totalorder %v44, %v652
    %vm690 = vcmp.eq.s32.totalorder %v44, %v656
    %vm691 = vcmp.eq.s32.totalorder %v45, %v652
    %vm692 = vcmp.eq.s32.totalorder %v45, %v656
    %vm693 = vcmp.eq.s32.totalorder %v46, %v652
    %vm694 = vcmp.eq.s32.totalorder %v46, %v656
    %vm695 = vcmp.eq.s32.totalorder %v47, %v652
    %vm696 = vcmp.eq.s32.totalorder %v47, %v656
    %vm697 = vcmp.eq.s32.totalorder %v48, %v652
    %vm698 = vcmp.eq.s32.totalorder %v48, %v656
    %vm699 = vcmp.eq.s32.totalorder %v49, %v652
    %vm700 = vcmp.eq.s32.totalorder %v49, %v656
    %vm701 = vcmp.eq.s32.totalorder %v50, %v652
    %vm702 = vcmp.eq.s32.totalorder %v50, %v656
    %vm703 = vcmp.eq.s32.totalorder %v51, %v652
    %vm704 = vcmp.eq.s32.totalorder %v51, %v656
    %vm705 = vcmp.eq.s32.totalorder %v52, %v652
    %vm706 = vcmp.eq.s32.totalorder %v52, %v656
    %vm707 = vcmp.eq.s32.totalorder %v53, %v652
    %vm708 = vcmp.eq.s32.totalorder %v53, %v656
    %vm709 = vcmp.eq.s32.totalorder %v54, %v652
    %vm710 = vcmp.eq.s32.totalorder %v54, %v656
    %vm711 = vcmp.eq.s32.totalorder %v55, %v652
    %vm712 = vcmp.eq.s32.totalorder %v55, %v656
    %vm713 = vcmp.eq.s32.totalorder %v56, %v652
    %vm714 = vcmp.eq.s32.totalorder %v56, %v656
    %vm715 = vcmp.eq.s32.totalorder %v57, %v652
    %vm716 = vcmp.eq.s32.totalorder %v57, %v656
    %vm717 = vcmp.eq.s32.totalorder %v58, %v652
    %vm718 = vcmp.eq.s32.totalorder %v58, %v656
    %vm719 = vcmp.eq.s32.totalorder %v59, %v652
    %vm720 = vcmp.eq.s32.totalorder %v59, %v656
    %v722 = vlaneseq
    %v723 = vshrl.u32 %v722, 7
    %v724 = vsub.s32 0, %v723
    %v725 = vrot.slane %v648, %v724
    %v726 = vlaneseq
    %v727 = vshrl.u32 %v726, 7
    %v728 = vsub.s32 1, %v727
    %v729 = vrot.slane %v648, %v728
    %v732 = vsel %vm657, %v725, 0.0
    %v733 = vsel %vm658, %v729, 0.0
    %v734 = vsel %vm659, %v725, 0.0
    %v735 = vsel %vm660, %v729, 0.0
    %v736 = vsel %vm661, %v725, 0.0
    %v737 = vsel %vm662, %v729, 0.0
    %v738 = vsel %vm663, %v725, 0.0
    %v739 = vsel %vm664, %v729, 0.0
    %v740 = vsel %vm665, %v725, 0.0
    %v741 = vsel %vm666, %v729, 0.0
    %v742 = vsel %vm667, %v725, 0.0
    %v743 = vsel %vm668, %v729, 0.0
    %v744 = vsel %vm669, %v725, 0.0
    %v745 = vsel %vm670, %v729, 0.0
    %v746 = vsel %vm671, %v725, 0.0
    %v747 = vsel %vm672, %v729, 0.0
    %v748 = vsel %vm673, %v725, 0.0
    %v749 = vsel %vm674, %v729, 0.0
    %v750 = vsel %vm675, %v725, 0.0
    %v751 = vsel %vm676, %v729, 0.0
    %v752 = vsel %vm677, %v725, 0.0
    %v753 = vsel %vm678, %v729, 0.0
    %v754 = vsel %vm679, %v725, 0.0
    %v755 = vsel %vm680, %v729, 0.0
    %v756 = vsel %vm681, %v725, 0.0
    %v757 = vsel %vm682, %v729, 0.0
    %v758 = vsel %vm683, %v725, 0.0
    %v759 = vsel %vm684, %v729, 0.0
    %v760 = vsel %vm685, %v725, 0.0
    %v761 = vsel %vm686, %v729, 0.0
    %v762 = vsel %vm687, %v725, 0.0
    %v763 = vsel %vm688, %v729, 0.0
    %v764 = vsel %vm689, %v725, 0.0
    %v765 = vsel %vm690, %v729, 0.0
    %v766 = vsel %vm691, %v725, 0.0
    %v767 = vsel %vm692, %v729, 0.0
    %v768 = vsel %vm693, %v725, 0.0
    %v769 = vsel %vm694, %v729, 0.0
    %v770 = vsel %vm695, %v725, 0.0
    %v771 = vsel %vm696, %v729, 0.0
    %v772 = vsel %vm697, %v725, 0.0
    %v773 = vsel %vm698, %v729, 0.0
    %v774 = vsel %vm699, %v725, 0.0
    %v775 = vsel %vm700, %v729, 0.0
    %v776 = vsel %vm701, %v725, 0.0
    %v777 = vsel %vm702, %v729, 0.0
    %v778 = vsel %vm703, %v725, 0.0
    %v779 = vsel %vm704, %v729, 0.0
    %v780 = vsel %vm705, %v725, 0.0
    %v781 = vsel %vm706, %v729, 0.0
    %v782 = vsel %vm707, %v725, 0.0
    %v783 = vsel %vm708, %v729, 0.0
    %v784 = vsel %vm709, %v725, 0.0
    %v785 = vsel %vm710, %v729, 0.0
    %v786 = vsel %vm711, %v725, 0.0
    %v787 = vsel %vm712, %v729, 0.0
    %v788 = vsel %vm713, %v725, 0.0
    %v789 = vsel %vm714, %v729, 0.0
    %v790 = vsel %vm715, %v725, 0.0
    %v791 = vsel %vm716, %v729, 0.0
    %v792 = vsel %vm717, %v725, 0.0
    %v793 = vsel %vm718, %v729, 0.0
    %v794 = vsel %vm719, %v725, 0.0
    %v795 = vsel %vm720, %v729, 0.0
    %v796 = vadd.f32 %v580, %v732
    %v797 = vadd.f32 %v581, %v733
    %v798 = vadd.f32 %v582, %v734
    %v799 = vadd.f32 %v583, %v735
    %v800 = vadd.f32 %v584, %v736
    %v801 = vadd.f32 %v585, %v737
    %v802 = vadd.f32 %v586, %v738
    %v803 = vadd.f32 %v587, %v739
    %v804 = vadd.f32 %v588, %v740
    %v805 = vadd.f32 %v589, %v741
    %v806 = vadd.f32 %v590, %v742
    %v807 = vadd.f32 %v591, %v743
    %v808 = vadd.f32 %v592, %v744
    %v809 = vadd.f32 %v593, %v745
    %v810 = vadd.f32 %v594, %v746
    %v811 = vadd.f32 %v595, %v747
    %v812 = vadd.f32 %v596, %v748
    %v813 = vadd.f32 %v597, %v749
    %v814 = vadd.f32 %v598, %v750
    %v815 = vadd.f32 %v599, %v751
    %v816 = vadd.f32 %v600, %v752
    %v817 = vadd.f32 %v601, %v753
    %v818 = vadd.f32 %v602, %v754
    %v819 = vadd.f32 %v603, %v755
    %v820 = vadd.f32 %v604, %v756
    %v821 = vadd.f32 %v605, %v757
    %v822 = vadd.f32 %v606, %v758
    %v823 = vadd.f32 %v607, %v759
    %v824 = vadd.f32 %v608, %v760
    %v825 = vadd.f32 %v609, %v761
    %v826 = vadd.f32 %v610, %v762
    %v827 = vadd.f32 %v611, %v763
    %v828 = vadd.f32 %v612, %v764
    %v829 = vadd.f32 %v613, %v765
    %v830 = vadd.f32 %v614, %v766
    %v831 = vadd.f32 %v615, %v767
    %v832 = vadd.f32 %v616, %v768
    %v833 = vadd.f32 %v617, %v769
    %v834 = vadd.f32 %v618, %v770
    %v835 = vadd.f32 %v619, %v771
    %v836 = vadd.f32 %v620, %v772
    %v837 = vadd.f32 %v621, %v773
    %v838 = vadd.f32 %v622, %v774
    %v839 = vadd.f32 %v623, %v775
    %v840 = vadd.f32 %v624, %v776
    %v841 = vadd.f32 %v625, %v777
    %v842 = vadd.f32 %v626, %v778
    %v843 = vadd.f32 %v627, %v779
    %v844 = vadd.f32 %v628, %v780
    %v845 = vadd.f32 %v629, %v781
    %v846 = vadd.f32 %v630, %v782
    %v847 = vadd.f32 %v631, %v783
    %v848 = vadd.f32 %v632, %v784
    %v849 = vadd.f32 %v633, %v785
    %v850 = vadd.f32 %v634, %v786
    %v851 = vadd.f32 %v635, %v787
    %v852 = vadd.f32 %v636, %v788
    %v853 = vadd.f32 %v637, %v789
    %v854 = vadd.f32 %v638, %v790
    %v855 = vadd.f32 %v639, %v791
    %v856 = vadd.f32 %v640, %v792
    %v857 = vadd.f32 %v641, %v793
    %v858 = vadd.f32 %v642, %v794
    %v859 = vadd.f32 %v643, %v795
    %s860 = scalar_lea.vmem %s0, 33
    %v861 = vld [vmem:[%s860] ss:$8 sm:$0x3]
    %v862 = vcvt.f32.s32.to.zero.pseudo %v861
    %s863 = scalar_lea.vmem %s0, 17
    %v864 = vld [vmem:[%s863] ss:$8 sm:$0x3]
    %v865 = vlaneseq
    %v866 = vshrl.u32 %v865, 7
    %v867 = vsub.s32 0, %v866
    %v868 = vrot.slane %v862, %v867
    %v869 = vlaneseq
    %v870 = vshrl.u32 %v869, 7
    %v871 = vsub.s32 1, %v870
    %v872 = vrot.slane %v862, %v871
    %vm873 = vcmp.eq.s32.totalorder %v28, %v868
    %vm874 = vcmp.eq.s32.totalorder %v28, %v872
    %vm875 = vcmp.eq.s32.totalorder %v29, %v868
    %vm876 = vcmp.eq.s32.totalorder %v29, %v872
    %vm877 = vcmp.eq.s32.totalorder %v30, %v868
    %vm878 = vcmp.eq.s32.totalorder %v30, %v872
    %vm879 = vcmp.eq.s32.totalorder %v31, %v868
    %vm880 = vcmp.eq.s32.totalorder %v31, %v872
    %vm881 = vcmp.eq.s32.totalorder %v32, %v868
    %vm882 = vcmp.eq.s32.totalorder %v32, %v872
    %vm883 = vcmp.eq.s32.totalorder %v33, %v868
    %vm884 = vcmp.eq.s32.totalorder %v33, %v872
    %vm885 = vcmp.eq.s32.totalorder %v34, %v868
    %vm886 = vcmp.eq.s32.totalorder %v34, %v872
    %vm887 = vcmp.eq.s32.totalorder %v35, %v868
    %vm888 = vcmp.eq.s32.totalorder %v35, %v872
    %vm889 = vcmp.eq.s32.totalorder %v36, %v868
    %vm890 = vcmp.eq.s32.totalorder %v36, %v872
    %vm891 = vcmp.eq.s32.totalorder %v37, %v868
    %vm892 = vcmp.eq.s32.totalorder %v37, %v872
    %vm893 = vcmp.eq.s32.totalorder %v38, %v868
    %vm894 = vcmp.eq.s32.totalorder %v38, %v872
    %vm895 = vcmp.eq.s32.totalorder %v39, %v868
    %vm896 = vcmp.eq.s32.totalorder %v39, %v872
    %vm897 = vcmp.eq.s32.totalorder %v40, %v868
    %vm898 = vcmp.eq.s32.totalorder %v40, %v872
    %vm899 = vcmp.eq.s32.totalorder %v41, %v868
    %vm900 = vcmp.eq.s32.totalorder %v41, %v872
    %vm901 = vcmp.eq.s32.totalorder %v42, %v868
    %vm902 = vcmp.eq.s32.totalorder %v42, %v872
    %vm903 = vcmp.eq.s32.totalorder %v43, %v868
    %vm904 = vcmp.eq.s32.totalorder %v43, %v872
    %vm905 = vcmp.eq.s32.totalorder %v44, %v868
    %vm906 = vcmp.eq.s32.totalorder %v44, %v872
    %vm907 = vcmp.eq.s32.totalorder %v45, %v868
    %vm908 = vcmp.eq.s32.totalorder %v45, %v872
    %vm909 = vcmp.eq.s32.totalorder %v46, %v868
    %vm910 = vcmp.eq.s32.totalorder %v46, %v872
    %vm911 = vcmp.eq.s32.totalorder %v47, %v868
    %vm912 = vcmp.eq.s32.totalorder %v47, %v872
    %vm913 = vcmp.eq.s32.totalorder %v48, %v868
    %vm914 = vcmp.eq.s32.totalorder %v48, %v872
    %vm915 = vcmp.eq.s32.totalorder %v49, %v868
    %vm916 = vcmp.eq.s32.totalorder %v49, %v872
    %vm917 = vcmp.eq.s32.totalorder %v50, %v868
    %vm918 = vcmp.eq.s32.totalorder %v50, %v872
    %vm919 = vcmp.eq.s32.totalorder %v51, %v868
    %vm920 = vcmp.eq.s32.totalorder %v51, %v872
    %vm921 = vcmp.eq.s32.totalorder %v52, %v868
    %vm922 = vcmp.eq.s32.totalorder %v52, %v872
    %vm923 = vcmp.eq.s32.totalorder %v53, %v868
    %vm924 = vcmp.eq.s32.totalorder %v53, %v872
    %vm925 = vcmp.eq.s32.totalorder %v54, %v868
    %vm926 = vcmp.eq.s32.totalorder %v54, %v872
    %vm927 = vcmp.eq.s32.totalorder %v55, %v868
    %vm928 = vcmp.eq.s32.totalorder %v55, %v872
    %vm929 = vcmp.eq.s32.totalorder %v56, %v868
    %vm930 = vcmp.eq.s32.totalorder %v56, %v872
    %vm931 = vcmp.eq.s32.totalorder %v57, %v868
    %vm932 = vcmp.eq.s32.totalorder %v57, %v872
    %vm933 = vcmp.eq.s32.totalorder %v58, %v868
    %vm934 = vcmp.eq.s32.totalorder %v58, %v872
    %vm935 = vcmp.eq.s32.totalorder %v59, %v868
    %vm936 = vcmp.eq.s32.totalorder %v59, %v872
    %v938 = vlaneseq
    %v939 = vshrl.u32 %v938, 7
    %v940 = vsub.s32 0, %v939
    %v941 = vrot.slane %v864, %v940
    %v942 = vlaneseq
    %v943 = vshrl.u32 %v942, 7
    %v944 = vsub.s32 1, %v943
    %v945 = vrot.slane %v864, %v944
    %v948 = vsel %vm873, %v941, 0.0
    %v949 = vsel %vm874, %v945, 0.0
    %v950 = vsel %vm875, %v941, 0.0
    %v951 = vsel %vm876, %v945, 0.0
    %v952 = vsel %vm877, %v941, 0.0
    %v953 = vsel %vm878, %v945, 0.0
    %v954 = vsel %vm879, %v941, 0.0
    %v955 = vsel %vm880, %v945, 0.0
    %v956 = vsel %vm881, %v941, 0.0
    %v957 = vsel %vm882, %v945, 0.0
    %v958 = vsel %vm883, %v941, 0.0
    %v959 = vsel %vm884, %v945, 0.0
    %v960 = vsel %vm885, %v941, 0.0
    %v961 = vsel %vm886, %v945, 0.0
    %v962 = vsel %vm887, %v941, 0.0
    %v963 = vsel %vm888, %v945, 0.0
    %v964 = vsel %vm889, %v941, 0.0
    %v965 = vsel %vm890, %v945, 0.0
    %v966 = vsel %vm891, %v941, 0.0
    %v967 = vsel %vm892, %v945, 0.0
    %v968 = vsel %vm893, %v941, 0.0
    %v969 = vsel %vm894, %v945, 0.0
    %v970 = vsel %vm895, %v941, 0.0
    %v971 = vsel %vm896, %v945, 0.0
    %v972 = vsel %vm897, %v941, 0.0
    %v973 = vsel %vm898, %v945, 0.0
    %v974 = vsel %vm899, %v941, 0.0
    %v975 = vsel %vm900, %v945, 0.0
    %v976 = vsel %vm901, %v941, 0.0
    %v977 = vsel %vm902, %v945, 0.0
    %v978 = vsel %vm903, %v941, 0.0
    %v979 = vsel %vm904, %v945, 0.0
    %v980 = vsel %vm905, %v941, 0.0
    %v981 = vsel %vm906, %v945, 0.0
    %v982 = vsel %vm907, %v941, 0.0
    %v983 = vsel %vm908, %v945, 0.0
    %v984 = vsel %vm909, %v941, 0.0
    %v985 = vsel %vm910, %v945, 0.0
    %v986 = vsel %vm911, %v941, 0.0
    %v987 = vsel %vm912, %v945, 0.0
    %v988 = vsel %vm913, %v941, 0.0
    %v989 = vsel %vm914, %v945, 0.0
    %v990 = vsel %vm915, %v941, 0.0
    %v991 = vsel %vm916, %v945, 0.0
    %v992 = vsel %vm917, %v941, 0.0
    %v993 = vsel %vm918, %v945, 0.0
    %v994 = vsel %vm919, %v941, 0.0
    %v995 = vsel %vm920, %v945, 0.0
    %v996 = vsel %vm921, %v941, 0.0
    %v997 = vsel %vm922, %v945, 0.0
    %v998 = vsel %vm923, %v941, 0.0
    %v999 = vsel %vm924, %v945, 0.0
    %v1000 = vsel %vm925, %v941, 0.0
    %v1001 = vsel %vm926, %v945, 0.0
    %v1002 = vsel %vm927, %v941, 0.0
    %v1003 = vsel %vm928, %v945, 0.0
    %v1004 = vsel %vm929, %v941, 0.0
    %v1005 = vsel %vm930, %v945, 0.0
    %v1006 = vsel %vm931, %v941, 0.0
    %v1007 = vsel %vm932, %v945, 0.0
    %v1008 = vsel %vm933, %v941, 0.0
    %v1009 = vsel %vm934, %v945, 0.0
    %v1010 = vsel %vm935, %v941, 0.0
    %v1011 = vsel %vm936, %v945, 0.0
    %s1012 = scalar_lea.vmem %s0, 34
    %v1013 = vld [vmem:[%s1012] ss:$8 sm:$0x3]
    %v1014 = vcvt.f32.s32.to.zero.pseudo %v1013
    %s1015 = scalar_lea.vmem %s0, 18
    %v1016 = vld [vmem:[%s1015] ss:$8 sm:$0x3]
    %v1017 = vlaneseq
    %v1018 = vshrl.u32 %v1017, 7
    %v1019 = vsub.s32 0, %v1018
    %v1020 = vrot.slane %v1014, %v1019
    %v1021 = vlaneseq
    %v1022 = vshrl.u32 %v1021, 7
    %v1023 = vsub.s32 1, %v1022
    %v1024 = vrot.slane %v1014, %v1023
    %vm1025 = vcmp.eq.s32.totalorder %v28, %v1020
    %vm1026 = vcmp.eq.s32.totalorder %v28, %v1024
    %vm1027 = vcmp.eq.s32.totalorder %v29, %v1020
    %vm1028 = vcmp.eq.s32.totalorder %v29, %v1024
    %vm1029 = vcmp.eq.s32.totalorder %v30, %v1020
    %vm1030 = vcmp.eq.s32.totalorder %v30, %v1024
    %vm1031 = vcmp.eq.s32.totalorder %v31, %v1020
    %vm1032 = vcmp.eq.s32.totalorder %v31, %v1024
    %vm1033 = vcmp.eq.s32.totalorder %v32, %v1020
    %vm1034 = vcmp.eq.s32.totalorder %v32, %v1024
    %vm1035 = vcmp.eq.s32.totalorder %v33, %v1020
    %vm1036 = vcmp.eq.s32.totalorder %v33, %v1024
    %vm1037 = vcmp.eq.s32.totalorder %v34, %v1020
    %vm1038 = vcmp.eq.s32.totalorder %v34, %v1024
    %vm1039 = vcmp.eq.s32.totalorder %v35, %v1020
    %vm1040 = vcmp.eq.s32.totalorder %v35, %v1024
    %vm1041 = vcmp.eq.s32.totalorder %v36, %v1020
    %vm1042 = vcmp.eq.s32.totalorder %v36, %v1024
    %vm1043 = vcmp.eq.s32.totalorder %v37, %v1020
    %vm1044 = vcmp.eq.s32.totalorder %v37, %v1024
    %vm1045 = vcmp.eq.s32.totalorder %v38, %v1020
    %vm1046 = vcmp.eq.s32.totalorder %v38, %v1024
    %vm1047 = vcmp.eq.s32.totalorder %v39, %v1020
    %vm1048 = vcmp.eq.s32.totalorder %v39, %v1024
    %vm1049 = vcmp.eq.s32.totalorder %v40, %v1020
    %vm1050 = vcmp.eq.s32.totalorder %v40, %v1024
    %vm1051 = vcmp.eq.s32.totalorder %v41, %v1020
    %vm1052 = vcmp.eq.s32.totalorder %v41, %v1024
    %vm1053 = vcmp.eq.s32.totalorder %v42, %v1020
    %vm1054 = vcmp.eq.s32.totalorder %v42, %v1024
    %vm1055 = vcmp.eq.s32.totalorder %v43, %v1020
    %vm1056 = vcmp.eq.s32.totalorder %v43, %v1024
    %vm1057 = vcmp.eq.s32.totalorder %v44, %v1020
    %vm1058 = vcmp.eq.s32.totalorder %v44, %v1024
    %vm1059 = vcmp.eq.s32.totalorder %v45, %v1020
    %vm1060 = vcmp.eq.s32.totalorder %v45, %v1024
    %vm1061 = vcmp.eq.s32.totalorder %v46, %v1020
    %vm1062 = vcmp.eq.s32.totalorder %v46, %v1024
    %vm1063 = vcmp.eq.s32.totalorder %v47, %v1020
    %vm1064 = vcmp.eq.s32.totalorder %v47, %v1024
    %vm1065 = vcmp.eq.s32.totalorder %v48, %v1020
    %vm1066 = vcmp.eq.s32.totalorder %v48, %v1024
    %vm1067 = vcmp.eq.s32.totalorder %v49, %v1020
    %vm1068 = vcmp.eq.s32.totalorder %v49, %v1024
    %vm1069 = vcmp.eq.s32.totalorder %v50, %v1020
    %vm1070 = vcmp.eq.s32.totalorder %v50, %v1024
    %vm1071 = vcmp.eq.s32.totalorder %v51, %v1020
    %vm1072 = vcmp.eq.s32.totalorder %v51, %v1024
    %vm1073 = vcmp.eq.s32.totalorder %v52, %v1020
    %vm1074 = vcmp.eq.s32.totalorder %v52, %v1024
    %vm1075 = vcmp.eq.s32.totalorder %v53, %v1020
    %vm1076 = vcmp.eq.s32.totalorder %v53, %v1024
    %vm1077 = vcmp.eq.s32.totalorder %v54, %v1020
    %vm1078 = vcmp.eq.s32.totalorder %v54, %v1024
    %vm1079 = vcmp.eq.s32.totalorder %v55, %v1020
    %vm1080 = vcmp.eq.s32.totalorder %v55, %v1024
    %vm1081 = vcmp.eq.s32.totalorder %v56, %v1020
    %vm1082 = vcmp.eq.s32.totalorder %v56, %v1024
    %vm1083 = vcmp.eq.s32.totalorder %v57, %v1020
    %vm1084 = vcmp.eq.s32.totalorder %v57, %v1024
    %vm1085 = vcmp.eq.s32.totalorder %v58, %v1020
    %vm1086 = vcmp.eq.s32.totalorder %v58, %v1024
    %vm1087 = vcmp.eq.s32.totalorder %v59, %v1020
    %vm1088 = vcmp.eq.s32.totalorder %v59, %v1024
    %v1090 = vlaneseq
    %v1091 = vshrl.u32 %v1090, 7
    %v1092 = vsub.s32 0, %v1091
    %v1093 = vrot.slane %v1016, %v1092
    %v1094 = vlaneseq
    %v1095 = vshrl.u32 %v1094, 7
    %v1096 = vsub.s32 1, %v1095
    %v1097 = vrot.slane %v1016, %v1096
    %v1100 = vsel %vm1025, %v1093, 0.0
    %v1101 = vsel %vm1026, %v1097, 0.0
    %v1102 = vsel %vm1027, %v1093, 0.0
    %v1103 = vsel %vm1028, %v1097, 0.0
    %v1104 = vsel %vm1029, %v1093, 0.0
    %v1105 = vsel %vm1030, %v1097, 0.0
    %v1106 = vsel %vm1031, %v1093, 0.0
    %v1107 = vsel %vm1032, %v1097, 0.0
    %v1108 = vsel %vm1033, %v1093, 0.0
    %v1109 = vsel %vm1034, %v1097, 0.0
    %v1110 = vsel %vm1035, %v1093, 0.0
    %v1111 = vsel %vm1036, %v1097, 0.0
    %v1112 = vsel %vm1037, %v1093, 0.0
    %v1113 = vsel %vm1038, %v1097, 0.0
    %v1114 = vsel %vm1039, %v1093, 0.0
    %v1115 = vsel %vm1040, %v1097, 0.0
    %v1116 = vsel %vm1041, %v1093, 0.0
    %v1117 = vsel %vm1042, %v1097, 0.0
    %v1118 = vsel %vm1043, %v1093, 0.0
    %v1119 = vsel %vm1044, %v1097, 0.0
    %v1120 = vsel %vm1045, %v1093, 0.0
    %v1121 = vsel %vm1046, %v1097, 0.0
    %v1122 = vsel %vm1047, %v1093, 0.0
    %v1123 = vsel %vm1048, %v1097, 0.0
    %v1124 = vsel %vm1049, %v1093, 0.0
    %v1125 = vsel %vm1050, %v1097, 0.0
    %v1126 = vsel %vm1051, %v1093, 0.0
    %v1127 = vsel %vm1052, %v1097, 0.0
    %v1128 = vsel %vm1053, %v1093, 0.0
    %v1129 = vsel %vm1054, %v1097, 0.0
    %v1130 = vsel %vm1055, %v1093, 0.0
    %v1131 = vsel %vm1056, %v1097, 0.0
    %v1132 = vsel %vm1057, %v1093, 0.0
    %v1133 = vsel %vm1058, %v1097, 0.0
    %v1134 = vsel %vm1059, %v1093, 0.0
    %v1135 = vsel %vm1060, %v1097, 0.0
    %v1136 = vsel %vm1061, %v1093, 0.0
    %v1137 = vsel %vm1062, %v1097, 0.0
    %v1138 = vsel %vm1063, %v1093, 0.0
    %v1139 = vsel %vm1064, %v1097, 0.0
    %v1140 = vsel %vm1065, %v1093, 0.0
    %v1141 = vsel %vm1066, %v1097, 0.0
    %v1142 = vsel %vm1067, %v1093, 0.0
    %v1143 = vsel %vm1068, %v1097, 0.0
    %v1144 = vsel %vm1069, %v1093, 0.0
    %v1145 = vsel %vm1070, %v1097, 0.0
    %v1146 = vsel %vm1071, %v1093, 0.0
    %v1147 = vsel %vm1072, %v1097, 0.0
    %v1148 = vsel %vm1073, %v1093, 0.0
    %v1149 = vsel %vm1074, %v1097, 0.0
    %v1150 = vsel %vm1075, %v1093, 0.0
    %v1151 = vsel %vm1076, %v1097, 0.0
    %v1152 = vsel %vm1077, %v1093, 0.0
    %v1153 = vsel %vm1078, %v1097, 0.0
    %v1154 = vsel %vm1079, %v1093, 0.0
    %v1155 = vsel %vm1080, %v1097, 0.0
    %v1156 = vsel %vm1081, %v1093, 0.0
    %v1157 = vsel %vm1082, %v1097, 0.0
    %v1158 = vsel %vm1083, %v1093, 0.0
    %v1159 = vsel %vm1084, %v1097, 0.0
    %v1160 = vsel %vm1085, %v1093, 0.0
    %v1161 = vsel %vm1086, %v1097, 0.0
    %v1162 = vsel %vm1087, %v1093, 0.0
    %v1163 = vsel %vm1088, %v1097, 0.0
    %v1164 = vadd.f32 %v948, %v1100
    %v1165 = vadd.f32 %v949, %v1101
    %v1166 = vadd.f32 %v950, %v1102
    %v1167 = vadd.f32 %v951, %v1103
    %v1168 = vadd.f32 %v952, %v1104
    %v1169 = vadd.f32 %v953, %v1105
    %v1170 = vadd.f32 %v954, %v1106
    %v1171 = vadd.f32 %v955, %v1107
    %v1172 = vadd.f32 %v956, %v1108
    %v1173 = vadd.f32 %v957, %v1109
    %v1174 = vadd.f32 %v958, %v1110
    %v1175 = vadd.f32 %v959, %v1111
    %v1176 = vadd.f32 %v960, %v1112
    %v1177 = vadd.f32 %v961, %v1113
    %v1178 = vadd.f32 %v962, %v1114
    %v1179 = vadd.f32 %v963, %v1115
    %v1180 = vadd.f32 %v964, %v1116
    %v1181 = vadd.f32 %v965, %v1117
    %v1182 = vadd.f32 %v966, %v1118
    %v1183 = vadd.f32 %v967, %v1119
    %v1184 = vadd.f32 %v968, %v1120
    %v1185 = vadd.f32 %v969, %v1121
    %v1186 = vadd.f32 %v970, %v1122
    %v1187 = vadd.f32 %v971, %v1123
    %v1188 = vadd.f32 %v972, %v1124
    %v1189 = vadd.f32 %v973, %v1125
    %v1190 = vadd.f32 %v974, %v1126
    %v1191 = vadd.f32 %v975, %v1127
    %v1192 = vadd.f32 %v976, %v1128
    %v1193 = vadd.f32 %v977, %v1129
    %v1194 = vadd.f32 %v978, %v1130
    %v1195 = vadd.f32 %v979, %v1131
    %v1196 = vadd.f32 %v980, %v1132
    %v1197 = vadd.f32 %v981, %v1133
    %v1198 = vadd.f32 %v982, %v1134
    %v1199 = vadd.f32 %v983, %v1135
    %v1200 = vadd.f32 %v984, %v1136
    %v1201 = vadd.f32 %v985, %v1137
    %v1202 = vadd.f32 %v986, %v1138
    %v1203 = vadd.f32 %v987, %v1139
    %v1204 = vadd.f32 %v988, %v1140
    %v1205 = vadd.f32 %v989, %v1141
    %v1206 = vadd.f32 %v990, %v1142
    %v1207 = vadd.f32 %v991, %v1143
    %v1208 = vadd.f32 %v992, %v1144
    %v1209 = vadd.f32 %v993, %v1145
    %v1210 = vadd.f32 %v994, %v1146
    %v1211 = vadd.f32 %v995, %v1147
    %v1212 = vadd.f32 %v996, %v1148
    %v1213 = vadd.f32 %v997, %v1149
    %v1214 = vadd.f32 %v998, %v1150
    %v1215 = vadd.f32 %v999, %v1151
    %v1216 = vadd.f32 %v1000, %v1152
    %v1217 = vadd.f32 %v1001, %v1153
    %v1218 = vadd.f32 %v1002, %v1154
    %v1219 = vadd.f32 %v1003, %v1155
    %v1220 = vadd.f32 %v1004, %v1156
    %v1221 = vadd.f32 %v1005, %v1157
    %v1222 = vadd.f32 %v1006, %v1158
    %v1223 = vadd.f32 %v1007, %v1159
    %v1224 = vadd.f32 %v1008, %v1160
    %v1225 = vadd.f32 %v1009, %v1161
    %v1226 = vadd.f32 %v1010, %v1162
    %v1227 = vadd.f32 %v1011, %v1163
    %s1228 = scalar_lea.vmem %s0, 35
    %v1229 = vld [vmem:[%s1228] ss:$8 sm:$0x3]
    %v1230 = vcvt.f32.s32.to.zero.pseudo %v1229
    %s1231 = scalar_lea.vmem %s0, 19
    %v1232 = vld [vmem:[%s1231] ss:$8 sm:$0x3]
    %v1233 = vlaneseq
    %v1234 = vshrl.u32 %v1233, 7
    %v1235 = vsub.s32 0, %v1234
    %v1236 = vrot.slane %v1230, %v1235
    %v1237 = vlaneseq
    %v1238 = vshrl.u32 %v1237, 7
    %v1239 = vsub.s32 1, %v1238
    %v1240 = vrot.slane %v1230, %v1239
    %vm1241 = vcmp.eq.s32.totalorder %v28, %v1236
    %vm1242 = vcmp.eq.s32.totalorder %v28, %v1240
    %vm1243 = vcmp.eq.s32.totalorder %v29, %v1236
    %vm1244 = vcmp.eq.s32.totalorder %v29, %v1240
    %vm1245 = vcmp.eq.s32.totalorder %v30, %v1236
    %vm1246 = vcmp.eq.s32.totalorder %v30, %v1240
    %vm1247 = vcmp.eq.s32.totalorder %v31, %v1236
    %vm1248 = vcmp.eq.s32.totalorder %v31, %v1240
    %vm1249 = vcmp.eq.s32.totalorder %v32, %v1236
    %vm1250 = vcmp.eq.s32.totalorder %v32, %v1240
    %vm1251 = vcmp.eq.s32.totalorder %v33, %v1236
    %vm1252 = vcmp.eq.s32.totalorder %v33, %v1240
    %vm1253 = vcmp.eq.s32.totalorder %v34, %v1236
    %vm1254 = vcmp.eq.s32.totalorder %v34, %v1240
    %vm1255 = vcmp.eq.s32.totalorder %v35, %v1236
    %vm1256 = vcmp.eq.s32.totalorder %v35, %v1240
    %vm1257 = vcmp.eq.s32.totalorder %v36, %v1236
    %vm1258 = vcmp.eq.s32.totalorder %v36, %v1240
    %vm1259 = vcmp.eq.s32.totalorder %v37, %v1236
    %vm1260 = vcmp.eq.s32.totalorder %v37, %v1240
    %vm1261 = vcmp.eq.s32.totalorder %v38, %v1236
    %vm1262 = vcmp.eq.s32.totalorder %v38, %v1240
    %vm1263 = vcmp.eq.s32.totalorder %v39, %v1236
    %vm1264 = vcmp.eq.s32.totalorder %v39, %v1240
    %vm1265 = vcmp.eq.s32.totalorder %v40, %v1236
    %vm1266 = vcmp.eq.s32.totalorder %v40, %v1240
    %vm1267 = vcmp.eq.s32.totalorder %v41, %v1236
    %vm1268 = vcmp.eq.s32.totalorder %v41, %v1240
    %vm1269 = vcmp.eq.s32.totalorder %v42, %v1236
    %vm1270 = vcmp.eq.s32.totalorder %v42, %v1240
    %vm1271 = vcmp.eq.s32.totalorder %v43, %v1236
    %vm1272 = vcmp.eq.s32.totalorder %v43, %v1240
    %vm1273 = vcmp.eq.s32.totalorder %v44, %v1236
    %vm1274 = vcmp.eq.s32.totalorder %v44, %v1240
    %vm1275 = vcmp.eq.s32.totalorder %v45, %v1236
    %vm1276 = vcmp.eq.s32.totalorder %v45, %v1240
    %vm1277 = vcmp.eq.s32.totalorder %v46, %v1236
    %vm1278 = vcmp.eq.s32.totalorder %v46, %v1240
    %vm1279 = vcmp.eq.s32.totalorder %v47, %v1236
    %vm1280 = vcmp.eq.s32.totalorder %v47, %v1240
    %vm1281 = vcmp.eq.s32.totalorder %v48, %v1236
    %vm1282 = vcmp.eq.s32.totalorder %v48, %v1240
    %vm1283 = vcmp.eq.s32.totalorder %v49, %v1236
    %vm1284 = vcmp.eq.s32.totalorder %v49, %v1240
    %vm1285 = vcmp.eq.s32.totalorder %v50, %v1236
    %vm1286 = vcmp.eq.s32.totalorder %v50, %v1240
    %vm1287 = vcmp.eq.s32.totalorder %v51, %v1236
    %vm1288 = vcmp.eq.s32.totalorder %v51, %v1240
    %vm1289 = vcmp.eq.s32.totalorder %v52, %v1236
    %vm1290 = vcmp.eq.s32.totalorder %v52, %v1240
    %vm1291 = vcmp.eq.s32.totalorder %v53, %v1236
    %vm1292 = vcmp.eq.s32.totalorder %v53, %v1240
    %vm1293 = vcmp.eq.s32.totalorder %v54, %v1236
    %vm1294 = vcmp.eq.s32.totalorder %v54, %v1240
    %vm1295 = vcmp.eq.s32.totalorder %v55, %v1236
    %vm1296 = vcmp.eq.s32.totalorder %v55, %v1240
    %vm1297 = vcmp.eq.s32.totalorder %v56, %v1236
    %vm1298 = vcmp.eq.s32.totalorder %v56, %v1240
    %vm1299 = vcmp.eq.s32.totalorder %v57, %v1236
    %vm1300 = vcmp.eq.s32.totalorder %v57, %v1240
    %vm1301 = vcmp.eq.s32.totalorder %v58, %v1236
    %vm1302 = vcmp.eq.s32.totalorder %v58, %v1240
    %vm1303 = vcmp.eq.s32.totalorder %v59, %v1236
    %vm1304 = vcmp.eq.s32.totalorder %v59, %v1240
    %v1306 = vlaneseq
    %v1307 = vshrl.u32 %v1306, 7
    %v1308 = vsub.s32 0, %v1307
    %v1309 = vrot.slane %v1232, %v1308
    %v1310 = vlaneseq
    %v1311 = vshrl.u32 %v1310, 7
    %v1312 = vsub.s32 1, %v1311
    %v1313 = vrot.slane %v1232, %v1312
    %v1316 = vsel %vm1241, %v1309, 0.0
    %v1317 = vsel %vm1242, %v1313, 0.0
    %v1318 = vsel %vm1243, %v1309, 0.0
    %v1319 = vsel %vm1244, %v1313, 0.0
    %v1320 = vsel %vm1245, %v1309, 0.0
    %v1321 = vsel %vm1246, %v1313, 0.0
    %v1322 = vsel %vm1247, %v1309, 0.0
    %v1323 = vsel %vm1248, %v1313, 0.0
    %v1324 = vsel %vm1249, %v1309, 0.0
    %v1325 = vsel %vm1250, %v1313, 0.0
    %v1326 = vsel %vm1251, %v1309, 0.0
    %v1327 = vsel %vm1252, %v1313, 0.0
    %v1328 = vsel %vm1253, %v1309, 0.0
    %v1329 = vsel %vm1254, %v1313, 0.0
    %v1330 = vsel %vm1255, %v1309, 0.0
    %v1331 = vsel %vm1256, %v1313, 0.0
    %v1332 = vsel %vm1257, %v1309, 0.0
    %v1333 = vsel %vm1258, %v1313, 0.0
    %v1334 = vsel %vm1259, %v1309, 0.0
    %v1335 = vsel %vm1260, %v1313, 0.0
    %v1336 = vsel %vm1261, %v1309, 0.0
    %v1337 = vsel %vm1262, %v1313, 0.0
    %v1338 = vsel %vm1263, %v1309, 0.0
    %v1339 = vsel %vm1264, %v1313, 0.0
    %v1340 = vsel %vm1265, %v1309, 0.0
    %v1341 = vsel %vm1266, %v1313, 0.0
    %v1342 = vsel %vm1267, %v1309, 0.0
    %v1343 = vsel %vm1268, %v1313, 0.0
    %v1344 = vsel %vm1269, %v1309, 0.0
    %v1345 = vsel %vm1270, %v1313, 0.0
    %v1346 = vsel %vm1271, %v1309, 0.0
    %v1347 = vsel %vm1272, %v1313, 0.0
    %v1348 = vsel %vm1273, %v1309, 0.0
    %v1349 = vsel %vm1274, %v1313, 0.0
    %v1350 = vsel %vm1275, %v1309, 0.0
    %v1351 = vsel %vm1276, %v1313, 0.0
    %v1352 = vsel %vm1277, %v1309, 0.0
    %v1353 = vsel %vm1278, %v1313, 0.0
    %v1354 = vsel %vm1279, %v1309, 0.0
    %v1355 = vsel %vm1280, %v1313, 0.0
    %v1356 = vsel %vm1281, %v1309, 0.0
    %v1357 = vsel %vm1282, %v1313, 0.0
    %v1358 = vsel %vm1283, %v1309, 0.0
    %v1359 = vsel %vm1284, %v1313, 0.0
    %v1360 = vsel %vm1285, %v1309, 0.0
    %v1361 = vsel %vm1286, %v1313, 0.0
    %v1362 = vsel %vm1287, %v1309, 0.0
    %v1363 = vsel %vm1288, %v1313, 0.0
    %v1364 = vsel %vm1289, %v1309, 0.0
    %v1365 = vsel %vm1290, %v1313, 0.0
    %v1366 = vsel %vm1291, %v1309, 0.0
    %v1367 = vsel %vm1292, %v1313, 0.0
    %v1368 = vsel %vm1293, %v1309, 0.0
    %v1369 = vsel %vm1294, %v1313, 0.0
    %v1370 = vsel %vm1295, %v1309, 0.0
    %v1371 = vsel %vm1296, %v1313, 0.0
    %v1372 = vsel %vm1297, %v1309, 0.0
    %v1373 = vsel %vm1298, %v1313, 0.0
    %v1374 = vsel %vm1299, %v1309, 0.0
    %v1375 = vsel %vm1300, %v1313, 0.0
    %v1376 = vsel %vm1301, %v1309, 0.0
    %v1377 = vsel %vm1302, %v1313, 0.0
    %v1378 = vsel %vm1303, %v1309, 0.0
    %v1379 = vsel %vm1304, %v1313, 0.0
    %v1380 = vadd.f32 %v1164, %v1316
    %v1381 = vadd.f32 %v1165, %v1317
    %v1382 = vadd.f32 %v1166, %v1318
    %v1383 = vadd.f32 %v1167, %v1319
    %v1384 = vadd.f32 %v1168, %v1320
    %v1385 = vadd.f32 %v1169, %v1321
    %v1386 = vadd.f32 %v1170, %v1322
    %v1387 = vadd.f32 %v1171, %v1323
    %v1388 = vadd.f32 %v1172, %v1324
    %v1389 = vadd.f32 %v1173, %v1325
    %v1390 = vadd.f32 %v1174, %v1326
    %v1391 = vadd.f32 %v1175, %v1327
    %v1392 = vadd.f32 %v1176, %v1328
    %v1393 = vadd.f32 %v1177, %v1329
    %v1394 = vadd.f32 %v1178, %v1330
    %v1395 = vadd.f32 %v1179, %v1331
    %v1396 = vadd.f32 %v1180, %v1332
    %v1397 = vadd.f32 %v1181, %v1333
    %v1398 = vadd.f32 %v1182, %v1334
    %v1399 = vadd.f32 %v1183, %v1335
    %v1400 = vadd.f32 %v1184, %v1336
    %v1401 = vadd.f32 %v1185, %v1337
    %v1402 = vadd.f32 %v1186, %v1338
    %v1403 = vadd.f32 %v1187, %v1339
    %v1404 = vadd.f32 %v1188, %v1340
    %v1405 = vadd.f32 %v1189, %v1341
    %v1406 = vadd.f32 %v1190, %v1342
    %v1407 = vadd.f32 %v1191, %v1343
    %v1408 = vadd.f32 %v1192, %v1344
    %v1409 = vadd.f32 %v1193, %v1345
    %v1410 = vadd.f32 %v1194, %v1346
    %v1411 = vadd.f32 %v1195, %v1347
    %v1412 = vadd.f32 %v1196, %v1348
    %v1413 = vadd.f32 %v1197, %v1349
    %v1414 = vadd.f32 %v1198, %v1350
    %v1415 = vadd.f32 %v1199, %v1351
    %v1416 = vadd.f32 %v1200, %v1352
    %v1417 = vadd.f32 %v1201, %v1353
    %v1418 = vadd.f32 %v1202, %v1354
    %v1419 = vadd.f32 %v1203, %v1355
    %v1420 = vadd.f32 %v1204, %v1356
    %v1421 = vadd.f32 %v1205, %v1357
    %v1422 = vadd.f32 %v1206, %v1358
    %v1423 = vadd.f32 %v1207, %v1359
    %v1424 = vadd.f32 %v1208, %v1360
    %v1425 = vadd.f32 %v1209, %v1361
    %v1426 = vadd.f32 %v1210, %v1362
    %v1427 = vadd.f32 %v1211, %v1363
    %v1428 = vadd.f32 %v1212, %v1364
    %v1429 = vadd.f32 %v1213, %v1365
    %v1430 = vadd.f32 %v1214, %v1366
    %v1431 = vadd.f32 %v1215, %v1367
    %v1432 = vadd.f32 %v1216, %v1368
    %v1433 = vadd.f32 %v1217, %v1369
    %v1434 = vadd.f32 %v1218, %v1370
    %v1435 = vadd.f32 %v1219, %v1371
    %v1436 = vadd.f32 %v1220, %v1372
    %v1437 = vadd.f32 %v1221, %v1373
    %v1438 = vadd.f32 %v1222, %v1374
    %v1439 = vadd.f32 %v1223, %v1375
    %v1440 = vadd.f32 %v1224, %v1376
    %v1441 = vadd.f32 %v1225, %v1377
    %v1442 = vadd.f32 %v1226, %v1378
    %v1443 = vadd.f32 %v1227, %v1379
    %s1444 = scalar_lea.vmem %s0, 36
    %v1445 = vld [vmem:[%s1444] ss:$8 sm:$0x3]
    %v1446 = vcvt.f32.s32.to.zero.pseudo %v1445
    %s1447 = scalar_lea.vmem %s0, 20
    %v1448 = vld [vmem:[%s1447] ss:$8 sm:$0x3]
    %v1449 = vlaneseq
    %v1450 = vshrl.u32 %v1449, 7
    %v1451 = vsub.s32 0, %v1450
    %v1452 = vrot.slane %v1446, %v1451
    %v1453 = vlaneseq
    %v1454 = vshrl.u32 %v1453, 7
    %v1455 = vsub.s32 1, %v1454
    %v1456 = vrot.slane %v1446, %v1455
    %vm1457 = vcmp.eq.s32.totalorder %v28, %v1452
    %vm1458 = vcmp.eq.s32.totalorder %v28, %v1456
    %vm1459 = vcmp.eq.s32.totalorder %v29, %v1452
    %vm1460 = vcmp.eq.s32.totalorder %v29, %v1456
    %vm1461 = vcmp.eq.s32.totalorder %v30, %v1452
    %vm1462 = vcmp.eq.s32.totalorder %v30, %v1456
    %vm1463 = vcmp.eq.s32.totalorder %v31, %v1452
    %vm1464 = vcmp.eq.s32.totalorder %v31, %v1456
    %vm1465 = vcmp.eq.s32.totalorder %v32, %v1452
    %vm1466 = vcmp.eq.s32.totalorder %v32, %v1456
    %vm1467 = vcmp.eq.s32.totalorder %v33, %v1452
    %vm1468 = vcmp.eq.s32.totalorder %v33, %v1456
    %vm1469 = vcmp.eq.s32.totalorder %v34, %v1452
    %vm1470 = vcmp.eq.s32.totalorder %v34, %v1456
    %vm1471 = vcmp.eq.s32.totalorder %v35, %v1452
    %vm1472 = vcmp.eq.s32.totalorder %v35, %v1456
    %vm1473 = vcmp.eq.s32.totalorder %v36, %v1452
    %vm1474 = vcmp.eq.s32.totalorder %v36, %v1456
    %vm1475 = vcmp.eq.s32.totalorder %v37, %v1452
    %vm1476 = vcmp.eq.s32.totalorder %v37, %v1456
    %vm1477 = vcmp.eq.s32.totalorder %v38, %v1452
    %vm1478 = vcmp.eq.s32.totalorder %v38, %v1456
    %vm1479 = vcmp.eq.s32.totalorder %v39, %v1452
    %vm1480 = vcmp.eq.s32.totalorder %v39, %v1456
    %vm1481 = vcmp.eq.s32.totalorder %v40, %v1452
    %vm1482 = vcmp.eq.s32.totalorder %v40, %v1456
    %vm1483 = vcmp.eq.s32.totalorder %v41, %v1452
    %vm1484 = vcmp.eq.s32.totalorder %v41, %v1456
    %vm1485 = vcmp.eq.s32.totalorder %v42, %v1452
    %vm1486 = vcmp.eq.s32.totalorder %v42, %v1456
    %vm1487 = vcmp.eq.s32.totalorder %v43, %v1452
    %vm1488 = vcmp.eq.s32.totalorder %v43, %v1456
    %vm1489 = vcmp.eq.s32.totalorder %v44, %v1452
    %vm1490 = vcmp.eq.s32.totalorder %v44, %v1456
    %vm1491 = vcmp.eq.s32.totalorder %v45, %v1452
    %vm1492 = vcmp.eq.s32.totalorder %v45, %v1456
    %vm1493 = vcmp.eq.s32.totalorder %v46, %v1452
    %vm1494 = vcmp.eq.s32.totalorder %v46, %v1456
    %vm1495 = vcmp.eq.s32.totalorder %v47, %v1452
    %vm1496 = vcmp.eq.s32.totalorder %v47, %v1456
    %vm1497 = vcmp.eq.s32.totalorder %v48, %v1452
    %vm1498 = vcmp.eq.s32.totalorder %v48, %v1456
    %vm1499 = vcmp.eq.s32.totalorder %v49, %v1452
    %vm1500 = vcmp.eq.s32.totalorder %v49, %v1456
    %vm1501 = vcmp.eq.s32.totalorder %v50, %v1452
    %vm1502 = vcmp.eq.s32.totalorder %v50, %v1456
    %vm1503 = vcmp.eq.s32.totalorder %v51, %v1452
    %vm1504 = vcmp.eq.s32.totalorder %v51, %v1456
    %vm1505 = vcmp.eq.s32.totalorder %v52, %v1452
    %vm1506 = vcmp.eq.s32.totalorder %v52, %v1456
    %vm1507 = vcmp.eq.s32.totalorder %v53, %v1452
    %vm1508 = vcmp.eq.s32.totalorder %v53, %v1456
    %vm1509 = vcmp.eq.s32.totalorder %v54, %v1452
    %vm1510 = vcmp.eq.s32.totalorder %v54, %v1456
    %vm1511 = vcmp.eq.s32.totalorder %v55, %v1452
    %vm1512 = vcmp.eq.s32.totalorder %v55, %v1456
    %vm1513 = vcmp.eq.s32.totalorder %v56, %v1452
    %vm1514 = vcmp.eq.s32.totalorder %v56, %v1456
    %vm1515 = vcmp.eq.s32.totalorder %v57, %v1452
    %vm1516 = vcmp.eq.s32.totalorder %v57, %v1456
    %vm1517 = vcmp.eq.s32.totalorder %v58, %v1452
    %vm1518 = vcmp.eq.s32.totalorder %v58, %v1456
    %vm1519 = vcmp.eq.s32.totalorder %v59, %v1452
    %vm1520 = vcmp.eq.s32.totalorder %v59, %v1456
    %v1522 = vlaneseq
    %v1523 = vshrl.u32 %v1522, 7
    %v1524 = vsub.s32 0, %v1523
    %v1525 = vrot.slane %v1448, %v1524
    %v1526 = vlaneseq
    %v1527 = vshrl.u32 %v1526, 7
    %v1528 = vsub.s32 1, %v1527
    %v1529 = vrot.slane %v1448, %v1528
    %v1532 = vsel %vm1457, %v1525, 0.0
    %v1533 = vsel %vm1458, %v1529, 0.0
    %v1534 = vsel %vm1459, %v1525, 0.0
    %v1535 = vsel %vm1460, %v1529, 0.0
    %v1536 = vsel %vm1461, %v1525, 0.0
    %v1537 = vsel %vm1462, %v1529, 0.0
    %v1538 = vsel %vm1463, %v1525, 0.0
    %v1539 = vsel %vm1464, %v1529, 0.0
    %v1540 = vsel %vm1465, %v1525, 0.0
    %v1541 = vsel %vm1466, %v1529, 0.0
    %v1542 = vsel %vm1467, %v1525, 0.0
    %v1543 = vsel %vm1468, %v1529, 0.0
    %v1544 = vsel %vm1469, %v1525, 0.0
    %v1545 = vsel %vm1470, %v1529, 0.0
    %v1546 = vsel %vm1471, %v1525, 0.0
    %v1547 = vsel %vm1472, %v1529, 0.0
    %v1548 = vsel %vm1473, %v1525, 0.0
    %v1549 = vsel %vm1474, %v1529, 0.0
    %v1550 = vsel %vm1475, %v1525, 0.0
    %v1551 = vsel %vm1476, %v1529, 0.0
    %v1552 = vsel %vm1477, %v1525, 0.0
    %v1553 = vsel %vm1478, %v1529, 0.0
    %v1554 = vsel %vm1479, %v1525, 0.0
    %v1555 = vsel %vm1480, %v1529, 0.0
    %v1556 = vsel %vm1481, %v1525, 0.0
    %v1557 = vsel %vm1482, %v1529, 0.0
    %v1558 = vsel %vm1483, %v1525, 0.0
    %v1559 = vsel %vm1484, %v1529, 0.0
    %v1560 = vsel %vm1485, %v1525, 0.0
    %v1561 = vsel %vm1486, %v1529, 0.0
    %v1562 = vsel %vm1487, %v1525, 0.0
    %v1563 = vsel %vm1488, %v1529, 0.0
    %v1564 = vsel %vm1489, %v1525, 0.0
    %v1565 = vsel %vm1490, %v1529, 0.0
    %v1566 = vsel %vm1491, %v1525, 0.0
    %v1567 = vsel %vm1492, %v1529, 0.0
    %v1568 = vsel %vm1493, %v1525, 0.0
    %v1569 = vsel %vm1494, %v1529, 0.0
    %v1570 = vsel %vm1495, %v1525, 0.0
    %v1571 = vsel %vm1496, %v1529, 0.0
    %v1572 = vsel %vm1497, %v1525, 0.0
    %v1573 = vsel %vm1498, %v1529, 0.0
    %v1574 = vsel %vm1499, %v1525, 0.0
    %v1575 = vsel %vm1500, %v1529, 0.0
    %v1576 = vsel %vm1501, %v1525, 0.0
    %v1577 = vsel %vm1502, %v1529, 0.0
    %v1578 = vsel %vm1503, %v1525, 0.0
    %v1579 = vsel %vm1504, %v1529, 0.0
    %v1580 = vsel %vm1505, %v1525, 0.0
    %v1581 = vsel %vm1506, %v1529, 0.0
    %v1582 = vsel %vm1507, %v1525, 0.0
    %v1583 = vsel %vm1508, %v1529, 0.0
    %v1584 = vsel %vm1509, %v1525, 0.0
    %v1585 = vsel %vm1510, %v1529, 0.0
    %v1586 = vsel %vm1511, %v1525, 0.0
    %v1587 = vsel %vm1512, %v1529, 0.0
    %v1588 = vsel %vm1513, %v1525, 0.0
    %v1589 = vsel %vm1514, %v1529, 0.0
    %v1590 = vsel %vm1515, %v1525, 0.0
    %v1591 = vsel %vm1516, %v1529, 0.0
    %v1592 = vsel %vm1517, %v1525, 0.0
    %v1593 = vsel %vm1518, %v1529, 0.0
    %v1594 = vsel %vm1519, %v1525, 0.0
    %v1595 = vsel %vm1520, %v1529, 0.0
    %v1596 = vadd.f32 %v1380, %v1532
    %v1597 = vadd.f32 %v1381, %v1533
    %v1598 = vadd.f32 %v1382, %v1534
    %v1599 = vadd.f32 %v1383, %v1535
    %v1600 = vadd.f32 %v1384, %v1536
    %v1601 = vadd.f32 %v1385, %v1537
    %v1602 = vadd.f32 %v1386, %v1538
    %v1603 = vadd.f32 %v1387, %v1539
    %v1604 = vadd.f32 %v1388, %v1540
    %v1605 = vadd.f32 %v1389, %v1541
    %v1606 = vadd.f32 %v1390, %v1542
    %v1607 = vadd.f32 %v1391, %v1543
    %v1608 = vadd.f32 %v1392, %v1544
    %v1609 = vadd.f32 %v1393, %v1545
    %v1610 = vadd.f32 %v1394, %v1546
    %v1611 = vadd.f32 %v1395, %v1547
    %v1612 = vadd.f32 %v1396, %v1548
    %v1613 = vadd.f32 %v1397, %v1549
    %v1614 = vadd.f32 %v1398, %v1550
    %v1615 = vadd.f32 %v1399, %v1551
    %v1616 = vadd.f32 %v1400, %v1552
    %v1617 = vadd.f32 %v1401, %v1553
    %v1618 = vadd.f32 %v1402, %v1554
    %v1619 = vadd.f32 %v1403, %v1555
    %v1620 = vadd.f32 %v1404, %v1556
    %v1621 = vadd.f32 %v1405, %v1557
    %v1622 = vadd.f32 %v1406, %v1558
    %v1623 = vadd.f32 %v1407, %v1559
    %v1624 = vadd.f32 %v1408, %v1560
    %v1625 = vadd.f32 %v1409, %v1561
    %v1626 = vadd.f32 %v1410, %v1562
    %v1627 = vadd.f32 %v1411, %v1563
    %v1628 = vadd.f32 %v1412, %v1564
    %v1629 = vadd.f32 %v1413, %v1565
    %v1630 = vadd.f32 %v1414, %v1566
    %v1631 = vadd.f32 %v1415, %v1567
    %v1632 = vadd.f32 %v1416, %v1568
    %v1633 = vadd.f32 %v1417, %v1569
    %v1634 = vadd.f32 %v1418, %v1570
    %v1635 = vadd.f32 %v1419, %v1571
    %v1636 = vadd.f32 %v1420, %v1572
    %v1637 = vadd.f32 %v1421, %v1573
    %v1638 = vadd.f32 %v1422, %v1574
    %v1639 = vadd.f32 %v1423, %v1575
    %v1640 = vadd.f32 %v1424, %v1576
    %v1641 = vadd.f32 %v1425, %v1577
    %v1642 = vadd.f32 %v1426, %v1578
    %v1643 = vadd.f32 %v1427, %v1579
    %v1644 = vadd.f32 %v1428, %v1580
    %v1645 = vadd.f32 %v1429, %v1581
    %v1646 = vadd.f32 %v1430, %v1582
    %v1647 = vadd.f32 %v1431, %v1583
    %v1648 = vadd.f32 %v1432, %v1584
    %v1649 = vadd.f32 %v1433, %v1585
    %v1650 = vadd.f32 %v1434, %v1586
    %v1651 = vadd.f32 %v1435, %v1587
    %v1652 = vadd.f32 %v1436, %v1588
    %v1653 = vadd.f32 %v1437, %v1589
    %v1654 = vadd.f32 %v1438, %v1590
    %v1655 = vadd.f32 %v1439, %v1591
    %v1656 = vadd.f32 %v1440, %v1592
    %v1657 = vadd.f32 %v1441, %v1593
    %v1658 = vadd.f32 %v1442, %v1594
    %v1659 = vadd.f32 %v1443, %v1595
    %1660 = vmatprep.subr.mxu0 %v827
    %1661 = vmatpush1.msra.mxu0 %v826
    %1662 = vmatprep.subr.mxu0 %v825
    %1663 = vmatpush1.msra.mxu0 %v824
    %1664 = vmatprep.subr.mxu0 %v823
    %1665 = vmatpush1.msra.mxu0 %v822
    %1666 = vmatprep.subr.mxu0 %v821
    %1667 = vmatpush1.msra.mxu0 %v820
    %1668 = vmatprep.subr.mxu0 %v819
    %1669 = vmatpush1.msra.mxu0 %v818
    %1670 = vmatprep.subr.mxu0 %v817
    %1671 = vmatpush1.msra.mxu0 %v816
    %1672 = vmatprep.subr.mxu0 %v815
    %1673 = vmatpush1.msra.mxu0 %v814
    %1674 = vmatprep.subr.mxu0 %v813
    %1675 = vmatpush1.msra.mxu0 %v812
    %1676 = vmatprep.subr.mxu0 %v811
    %1677 = vmatpush1.msra.mxu0 %v810
    %1678 = vmatprep.subr.mxu0 %v809
    %1679 = vmatpush1.msra.mxu0 %v808
    %1680 = vmatprep.subr.mxu0 %v807
    %1681 = vmatpush1.msra.mxu0 %v806
    %1682 = vmatprep.subr.mxu0 %v805
    %1683 = vmatpush1.msra.mxu0 %v804
    %1684 = vmatprep.subr.mxu0 %v803
    %1685 = vmatpush1.msra.mxu0 %v802
    %1686 = vmatprep.subr.mxu0 %v801
    %1687 = vmatpush1.msra.mxu0 %v800
    %1688 = vmatprep.subr.mxu0 %v799
    %1689 = vmatpush1.msra.mxu0 %v798
    %1690 = vmatprep.subr.mxu0 %v797
    %1691 = vmatpush1.msra.mxu0 %v796
    %1692 = vmatprep.subr.mxu0 %v859
    %1693 = vmatpush2.msra.mxu0 %v858
    %1694 = vmatprep.subr.mxu0 %v857
    %1695 = vmatpush2.msra.mxu0 %v856
    %1696 = vmatprep.subr.mxu0 %v855
    %1697 = vmatpush2.msra.mxu0 %v854
    %1698 = vmatprep.subr.mxu0 %v853
    %1699 = vmatpush2.msra.mxu0 %v852
    %1700 = vmatprep.subr.mxu0 %v851
    %1701 = vmatpush2.msra.mxu0 %v850
    %1702 = vmatprep.subr.mxu0 %v849
    %1703 = vmatpush2.msra.mxu0 %v848
    %1704 = vmatprep.subr.mxu0 %v847
    %1705 = vmatpush2.msra.mxu0 %v846
    %1706 = vmatprep.subr.mxu0 %v845
    %1707 = vmatpush2.msra.mxu0 %v844
    %1708 = vmatprep.subr.mxu0 %v843
    %1709 = vmatpush2.msra.mxu0 %v842
    %1710 = vmatprep.subr.mxu0 %v841
    %1711 = vmatpush2.msra.mxu0 %v840
    %1712 = vmatprep.subr.mxu0 %v839
    %1713 = vmatpush2.msra.mxu0 %v838
    %1714 = vmatprep.subr.mxu0 %v837
    %1715 = vmatpush2.msra.mxu0 %v836
    %1716 = vmatprep.subr.mxu0 %v835
    %1717 = vmatpush2.msra.mxu0 %v834
    %1718 = vmatprep.subr.mxu0 %v833
    %1719 = vmatpush2.msra.mxu0 %v832
    %1720 = vmatprep.subr.mxu0 %v831
    %1721 = vmatpush2.msra.mxu0 %v830
    %1722 = vmatprep.subr.mxu0 %v829
    %1723 = vmatpush2.msra.mxu0 %v828
    %1724 = vmatprep.mubr.f32.mxu0 %v26
    %1725 = vmatmul.mubr.f32.gmra.mxu0 %v25
    %v1726 = vpop.f32.mrf.mxu0
    %v1727 = vadd.f32 0.0, %v1726
    %v1728 = vpop.f32.mrf.mxu0
    %v1729 = vadd.f32 0.0, %v1728
    %1730 = vdwg.mxu0
    %1731 = vmatprep.subr.mxu0 %v1627
    %1732 = vmatpush1.msra.mxu0 %v1626
    %1733 = vmatprep.subr.mxu0 %v1625
    %1734 = vmatpush1.msra.mxu0 %v1624
    %1735 = vmatprep.subr.mxu0 %v1623
    %1736 = vmatpush1.msra.mxu0 %v1622
    %1737 = vmatprep.subr.mxu0 %v1621
    %1738 = vmatpush1.msra.mxu0 %v1620
    %1739 = vmatprep.subr.mxu0 %v1619
    %1740 = vmatpush1.msra.mxu0 %v1618
    %1741 = vmatprep.subr.mxu0 %v1617
    %1742 = vmatpush1.msra.mxu0 %v1616
    %1743 = vmatprep.subr.mxu0 %v1615
    %1744 = vmatpush1.msra.mxu0 %v1614
    %1745 = vmatprep.subr.mxu0 %v1613
    %1746 = vmatpush1.msra.mxu0 %v1612
    %1747 = vmatprep.subr.mxu0 %v1611
    %1748 = vmatpush1.msra.mxu0 %v1610
    %1749 = vmatprep.subr.mxu0 %v1609
    %1750 = vmatpush1.msra.mxu0 %v1608
    %1751 = vmatprep.subr.mxu0 %v1607
    %1752 = vmatpush1.msra.mxu0 %v1606
    %1753 = vmatprep.subr.mxu0 %v1605
    %1754 = vmatpush1.msra.mxu0 %v1604
    %1755 = vmatprep.subr.mxu0 %v1603
    %1756 = vmatpush1.msra.mxu0 %v1602
    %1757 = vmatprep.subr.mxu0 %v1601
    %1758 = vmatpush1.msra.mxu0 %v1600
    %1759 = vmatprep.subr.mxu0 %v1599
    %1760 = vmatpush1.msra.mxu0 %v1598
    %1761 = vmatprep.subr.mxu0 %v1597
    %1762 = vmatpush1.msra.mxu0 %v1596
    %1763 = vmatprep.subr.mxu0 %v1659
    %1764 = vmatpush2.msra.mxu0 %v1658
    %1765 = vmatprep.subr.mxu0 %v1657
    %1766 = vmatpush2.msra.mxu0 %v1656
    %1767 = vmatprep.subr.mxu0 %v1655
    %1768 = vmatpush2.msra.mxu0 %v1654
    %1769 = vmatprep.subr.mxu0 %v1653
    %1770 = vmatpush2.msra.mxu0 %v1652
    %1771 = vmatprep.subr.mxu0 %v1651
    %1772 = vmatpush2.msra.mxu0 %v1650
    %1773 = vmatprep.subr.mxu0 %v1649
    %1774 = vmatpush2.msra.mxu0 %v1648
    %1775 = vmatprep.subr.mxu0 %v1647
    %1776 = vmatpush2.msra.mxu0 %v1646
    %1777 = vmatprep.subr.mxu0 %v1645
    %1778 = vmatpush2.msra.mxu0 %v1644
    %1779 = vmatprep.subr.mxu0 %v1643
    %1780 = vmatpush2.msra.mxu0 %v1642
    %1781 = vmatprep.subr.mxu0 %v1641
    %1782 = vmatpush2.msra.mxu0 %v1640
    %1783 = vmatprep.subr.mxu0 %v1639
    %1784 = vmatpush2.msra.mxu0 %v1638
    %1785 = vmatprep.subr.mxu0 %v1637
    %1786 = vmatpush2.msra.mxu0 %v1636
    %1787 = vmatprep.subr.mxu0 %v1635
    %1788 = vmatpush2.msra.mxu0 %v1634
    %1789 = vmatprep.subr.mxu0 %v1633
    %1790 = vmatpush2.msra.mxu0 %v1632
    %1791 = vmatprep.subr.mxu0 %v1631
    %1792 = vmatpush2.msra.mxu0 %v1630
    %1793 = vmatprep.subr.mxu0 %v1629
    %1794 = vmatpush2.msra.mxu0 %v1628
    %1795 = vmatprep.mubr.f32.mxu0 %v26
    %1796 = vmatmul.mubr.f32.gmra.mxu0 %v25
    %v1797 = vpop.f32.mrf.mxu0
    %v1798 = vadd.f32 0.0, %v1797
    %v1799 = vpop.f32.mrf.mxu0
    %v1800 = vadd.f32 0.0, %v1799
    %1801 = vdwg.mxu0
    %v1802 = vld [vmem:[#allocation2] sm:$0xff]
    %v1803 = vld [vmem:[#allocation2 + $0x8] sm:$0xff]
    %v1804 = vld [vmem:[#allocation2 + $0x10] sm:$0xff]
    %v1805 = vld [vmem:[#allocation2 + $0x18] sm:$0xff]
    %v1806 = vld [vmem:[#allocation2 + $0x20] sm:$0xff]
    %v1807 = vld [vmem:[#allocation2 + $0x28] sm:$0xff]
    %v1808 = vld [vmem:[#allocation2 + $0x30] sm:$0xff]
    %v1809 = vld [vmem:[#allocation2 + $0x38] sm:$0xff]
    %v1810 = vld [vmem:[#allocation2 + $0x40] sm:$0xff]
    %v1811 = vld [vmem:[#allocation2 + $0x48] sm:$0xff]
    %v1812 = vld [vmem:[#allocation2 + $0x50] sm:$0xff]
    %v1813 = vld [vmem:[#allocation2 + $0x58] sm:$0xff]
    %v1814 = vld [vmem:[#allocation2 + $0x60] sm:$0xff]
    %v1815 = vld [vmem:[#allocation2 + $0x68] sm:$0xff]
    %v1816 = vld [vmem:[#allocation2 + $0x70] sm:$0xff]
    %v1817 = vld [vmem:[#allocation2 + $0x78] sm:$0xff]
    %v1818 = vld [vmem:[#allocation2 + $0x80] sm:$0xff]
    %v1819 = vld [vmem:[#allocation2 + $0x88] sm:$0xff]
    %v1820 = vld [vmem:[#allocation2 + $0x90] sm:$0xff]
    %v1821 = vld [vmem:[#allocation2 + $0x98] sm:$0xff]
    %v1822 = vld [vmem:[#allocation2 + $0xa0] sm:$0xff]
    %v1823 = vld [vmem:[#allocation2 + $0xa8] sm:$0xff]
    %v1824 = vld [vmem:[#allocation2 + $0xb0] sm:$0xff]
    %v1825 = vld [vmem:[#allocation2 + $0xb8] sm:$0xff]
    %v1826 = vld [vmem:[#allocation2 + $0xc0] sm:$0xff]
    %v1827 = vld [vmem:[#allocation2 + $0xc8] sm:$0xff]
    %v1828 = vld [vmem:[#allocation2 + $0xd0] sm:$0xff]
    %v1829 = vld [vmem:[#allocation2 + $0xd8] sm:$0xff]
    %v1830 = vld [vmem:[#allocation2 + $0xe0] sm:$0xff]
    %v1831 = vld [vmem:[#allocation2 + $0xe8] sm:$0xff]
    %v1832 = vld [vmem:[#allocation2 + $0xf0] sm:$0xff]
    %v1833 = vld [vmem:[#allocation2 + $0xf8] sm:$0xff]
    %v1834 = vld [vmem:[#allocation2 + $0x100] sm:$0xff]
    %v1835 = vld [vmem:[#allocation2 + $0x108] sm:$0xff]
    %v1836 = vld [vmem:[#allocation2 + $0x110] sm:$0xff]
    %v1837 = vld [vmem:[#allocation2 + $0x118] sm:$0xff]
    %v1838 = vld [vmem:[#allocation2 + $0x120] sm:$0xff]
    %v1839 = vld [vmem:[#allocation2 + $0x128] sm:$0xff]
    %v1840 = vld [vmem:[#allocation2 + $0x130] sm:$0xff]
    %v1841 = vld [vmem:[#allocation2 + $0x138] sm:$0xff]
    %v1842 = vld [vmem:[#allocation2 + $0x140] sm:$0xff]
    %v1843 = vld [vmem:[#allocation2 + $0x148] sm:$0xff]
    %v1844 = vld [vmem:[#allocation2 + $0x150] sm:$0xff]
    %v1845 = vld [vmem:[#allocation2 + $0x158] sm:$0xff]
    %v1846 = vld [vmem:[#allocation2 + $0x160] sm:$0xff]
    %v1847 = vld [vmem:[#allocation2 + $0x168] sm:$0xff]
    %v1848 = vld [vmem:[#allocation2 + $0x170] sm:$0xff]
    %v1849 = vld [vmem:[#allocation2 + $0x178] sm:$0xff]
    %v1850 = vld [vmem:[#allocation2 + $0x180] sm:$0xff]
    %v1851 = vld [vmem:[#allocation2 + $0x188] sm:$0xff]
    %v1852 = vld [vmem:[#allocation2 + $0x190] sm:$0xff]
    %v1853 = vld [vmem:[#allocation2 + $0x198] sm:$0xff]
    %v1854 = vld [vmem:[#allocation2 + $0x1a0] sm:$0xff]
    %v1855 = vld [vmem:[#allocation2 + $0x1a8] sm:$0xff]
    %v1856 = vld [vmem:[#allocation2 + $0x1b0] sm:$0xff]
    %v1857 = vld [vmem:[#allocation2 + $0x1b8] sm:$0xff]
    %v1858 = vld [vmem:[#allocation2 + $0x1c0] sm:$0xff]
    %v1859 = vld [vmem:[#allocation2 + $0x1c8] sm:$0xff]
    %v1860 = vld [vmem:[#allocation2 + $0x1d0] sm:$0xff]
    %v1861 = vld [vmem:[#allocation2 + $0x1d8] sm:$0xff]
    %v1862 = vld [vmem:[#allocation2 + $0x1e0] sm:$0xff]
    %v1863 = vld [vmem:[#allocation2 + $0x1e8] sm:$0xff]
    %v1864 = vld [vmem:[#allocation2 + $0x1f0] sm:$0xff]
    %v1865 = vld [vmem:[#allocation2 + $0x1f8] sm:$0xff]
    %1866 = vmatprep.subr.mxu0 %v1833
    %1867 = vmatpush1.msra.mxu0 %v1832
    %1868 = vmatprep.subr.mxu0 %v1831
    %1869 = vmatpush1.msra.mxu0 %v1830
    %1870 = vmatprep.subr.mxu0 %v1829
    %1871 = vmatpush1.msra.mxu0 %v1828
    %1872 = vmatprep.subr.mxu0 %v1827
    %1873 = vmatpush1.msra.mxu0 %v1826
    %1874 = vmatprep.subr.mxu0 %v1825
    %1875 = vmatpush1.msra.mxu0 %v1824
    %1876 = vmatprep.subr.mxu0 %v1823
    %1877 = vmatpush1.msra.mxu0 %v1822
    %1878 = vmatprep.subr.mxu0 %v1821
    %1879 = vmatpush1.msra.mxu0 %v1820
    %1880 = vmatprep.subr.mxu0 %v1819
    %1881 = vmatpush1.msra.mxu0 %v1818
    %1882 = vmatprep.subr.mxu0 %v1817
    %1883 = vmatpush1.msra.mxu0 %v1816
    %1884 = vmatprep.subr.mxu0 %v1815
    %1885 = vmatpush1.msra.mxu0 %v1814
    %1886 = vmatprep.subr.mxu0 %v1813
    %1887 = vmatpush1.msra.mxu0 %v1812
    %1888 = vmatprep.subr.mxu0 %v1811
    %1889 = vmatpush1.msra.mxu0 %v1810
    %1890 = vmatprep.subr.mxu0 %v1809
    %1891 = vmatpush1.msra.mxu0 %v1808
    %1892 = vmatprep.subr.mxu0 %v1807
    %1893 = vmatpush1.msra.mxu0 %v1806
    %1894 = vmatprep.subr.mxu0 %v1805
    %1895 = vmatpush1.msra.mxu0 %v1804
    %1896 = vmatprep.subr.mxu0 %v1803
    %1897 = vmatpush1.msra.mxu0 %v1802
    %1898 = vmatprep.subr.mxu0 %v1865
    %1899 = vmatpush2.msra.mxu0 %v1864
    %1900 = vmatprep.subr.mxu0 %v1863
    %1901 = vmatpush2.msra.mxu0 %v1862
    %1902 = vmatprep.subr.mxu0 %v1861
    %1903 = vmatpush2.msra.mxu0 %v1860
    %1904 = vmatprep.subr.mxu0 %v1859
    %1905 = vmatpush2.msra.mxu0 %v1858
    %1906 = vmatprep.subr.mxu0 %v1857
    %1907 = vmatpush2.msra.mxu0 %v1856
    %1908 = vmatprep.subr.mxu0 %v1855
    %1909 = vmatpush2.msra.mxu0 %v1854
    %1910 = vmatprep.subr.mxu0 %v1853
    %1911 = vmatpush2.msra.mxu0 %v1852
    %1912 = vmatprep.subr.mxu0 %v1851
    %1913 = vmatpush2.msra.mxu0 %v1850
    %1914 = vmatprep.subr.mxu0 %v1849
    %1915 = vmatpush2.msra.mxu0 %v1848
    %1916 = vmatprep.subr.mxu0 %v1847
    %1917 = vmatpush2.msra.mxu0 %v1846
    %1918 = vmatprep.subr.mxu0 %v1845
    %1919 = vmatpush2.msra.mxu0 %v1844
    %1920 = vmatprep.subr.mxu0 %v1843
    %1921 = vmatpush2.msra.mxu0 %v1842
    %1922 = vmatprep.subr.mxu0 %v1841
    %1923 = vmatpush2.msra.mxu0 %v1840
    %1924 = vmatprep.subr.mxu0 %v1839
    %1925 = vmatpush2.msra.mxu0 %v1838
    %1926 = vmatprep.subr.mxu0 %v1837
    %1927 = vmatpush2.msra.mxu0 %v1836
    %1928 = vmatprep.subr.mxu0 %v1835
    %1929 = vmatpush2.msra.mxu0 %v1834
    %1930 = vmatprep.mubr.f32.mxu0 %v26
    %1931 = vmatmul.mubr.f32.gmra.mxu0 %v25
    %v1932 = vpop.f32.mrf.mxu0
    %v1933 = vadd.f32 0.0, %v1932
    %v1934 = vpop.f32.mrf.mxu0
    %v1935 = vadd.f32 0.0, %v1934
    %1936 = vdwg.mxu0
    %s1937 = scalar_lea.vmem %s0, 37
    %v1938 = vld [vmem:[%s1937] ss:$8 sm:$0x3]
    %v1941 = vrot.slane %v1727, 7
    %v1942 = vrot.slane %v1729, 7
    %v1945 = vsub.f32 %v1798, %v1941
    %v1946 = vsub.f32 %v1800, %v1942
    %v1947 = vand.u32 2147483647, %v1945
    %v1948 = vand.u32 2147483647, %v1946
    %v1951 = vrot.slane %v1947, 1
    %v1952 = vrot.slane %v1948, 1
    %vm1955 = vcmask 1040384
    %v1956 = vsel %vm1955, %v1951, 0.0
    %v1957 = vsel %vm1955, %v1952, 0.0
    %v1958 = vadd.f32 %v1956, %v1957
    %1959 = vadd.xlane.f32.xlu0 %v1958
    %v1960 = vpop.xlane.xlu0 %1959
    %v1961 = vrot.slane %v1960, 4
    %v1962 = vadd.f32 %v1960, %v1961
    %v1963 = vrot.slane %v1962, 2
    %v1964 = vadd.f32 %v1962, %v1963
    %v1965 = vrot.slane %v1964, 1
    %v1966 = vadd.f32 %v1964, %v1965
    %s1967 = vtos %v1966
    %v1968 = vstv %s1967
    %1971 = vrot.lane.b32.xlu0 %v1945, 32
    %v1972 = vpop.permute.xlu0 %1971
    %1973 = vrot.lane.b32.xlu0 %v1946, 32
    %v1974 = vpop.permute.xlu0 %1973
    %vm1975 = vcmask 261120
    %v1976 = vsel %vm1975, %v1972, %v1974
    %v1979 = vsub.f32 %v1945, %v1972
    %v1980 = vsub.f32 %v1946, %v1976
    %v1981 = vmul.f32 %v1979, 0.5
    %v1982 = vmul.f32 %v1980, 0.5
    %1983 = vrot.lane.b32.xlu0 %v1945, 2
    %v1984 = vpop.permute.xlu0 %1983
    %1985 = vrot.lane.b32.xlu0 %v1946, 2
    %v1986 = vpop.permute.xlu0 %1985
    %vm1987 = vcmask 15360
    %v1988 = vsel %vm1987, %v1984, %v1986
    %v1991 = vsub.f32 %v1945, %v1984
    %v1992 = vsub.f32 %v1946, %v1988
    %v1993 = vmul.f32 %v1991, 0.5
    %v1994 = vmul.f32 %v1992, 0.5
    %v1995 = vand.u32 2147483647, %v1981
    %v1996 = vand.u32 2147483647, %v1982
    %1999 = vrot.lane.b32.xlu0 %v1995, 96
    %v2000 = vpop.permute.xlu0 %1999
    %2001 = vrot.lane.b32.xlu0 %v1996, 96
    %v2002 = vpop.permute.xlu0 %2001
    %vm2003 = vcmask 785408
    %v2004 = vsel %vm2003, %v2000, %v2002
    %vm2007 = vcmask 1041409
    %v2008 = vsel %vm2007, %v2004, 0.0
    %vm2009 = vcmask 779265
    %v2010 = vsel %vm2009, %v2002, 0.0
    %v2011 = vadd.f32 %v2008, %v2010
    %2012 = vadd.xlane.f32.xlu0 %v2011
    %v2013 = vpop.xlane.xlu0 %2012
    %v2014 = vand.u32 2147483647, %v1993
    %v2015 = vand.u32 2147483647, %v1994
    %v2017 = vlaneseq
    %v2018 = vshrl.u32 %v2017, 7
    %v2019 = vsub.s32 0, %v2018
    %v2020 = vrot.slane %v1938, %v2019
    %v2021 = vlaneseq
    %v2022 = vshrl.u32 %v2021, 7
    %v2023 = vsub.s32 1, %v2022
    %v2024 = vrot.slane %v1938, %v2023
    %2025 = vrot.lane.b32.xlu0 %v2020, 2
    %v2026 = vpop.permute.xlu0 %2025
    %2027 = vrot.lane.b32.xlu0 %v2024, 2
    %v2028 = vpop.permute.xlu0 %2027
    %v2029 = vsel %vm1987, %v2026, %v2028
    %v2032 = vmul.f32 %v2014, %v2026
    %v2033 = vmul.f32 %v2015, %v2029
    %2036 = vrot.lane.b32.xlu0 %v2032, 126
    %v2037 = vpop.permute.xlu0 %2036
    %2038 = vrot.lane.b32.xlu0 %v2033, 126
    %v2039 = vpop.permute.xlu0 %2038
    %vm2040 = vcmask 1031168
    %v2041 = vsel %vm2040, %v2037, %v2039
    %v2044 = vsel %vm2007, %v2041, 0.0
    %vm2045 = vcmask 1025025
    %v2046 = vsel %vm2045, %v2039, 0.0
    %v2047 = vadd.f32 %v2044, %v2046
    %2048 = vadd.xlane.f32.xlu0 %v2047
    %v2049 = vpop.xlane.xlu0 %2048
    %v2050 = vadd.f32 %v2013, %v2049
    %v2051 = vmul.f32 %v1968, %v1968
    %v2052 = vmul.f32 %v2050, %v2050
    %v2053 = vmul.f32 %v2052, 2.0
    %v2054 = vadd.f32 %v2051, %v2053
    %v2055 = vadd.f32 %v2054, 1e-06
    %v2056 = vrsqrt.pop %v2055
    %v2057 = vmul.f32 %v2055, %v2056
    %vm2058 = vcmp.eq.f32.partialorder %v2055, inf
    %v2059 = vsel %vm2058, %v2055, %v2057
    %vm2060 = vcmp.eq.f32.partialorder %v2055, 0.0
    %v2061 = vand.u32 %v2055, 2147483648
    %v2062 = vsel %vm2060, %v2061, %v2059
    %2065 = vrot.lane.b32.xlu0 %v1933, 32
    %v2066 = vpop.permute.xlu0 %2065
    %2067 = vrot.lane.b32.xlu0 %v1935, 32
    %v2068 = vpop.permute.xlu0 %2067
    %v2069 = vsel %vm1975, %v2066, %v2068
    %v2072 = vsub.f32 %v1933, %v2066
    %v2073 = vsub.f32 %v1935, %v2069
    %v2074 = vmul.f32 %v2072, 0.5
    %v2075 = vmul.f32 %v2073, 0.5
    %2076 = vrot.lane.b32.xlu0 %v1933, 2
    %v2077 = vpop.permute.xlu0 %2076
    %2078 = vrot.lane.b32.xlu0 %v1935, 2
    %v2079 = vpop.permute.xlu0 %2078
    %v2080 = vsel %vm1987, %v2077, %v2079
    %v2083 = vsub.f32 %v1933, %v2077
    %v2084 = vsub.f32 %v1935, %v2080
    %v2085 = vmul.f32 %v2083, 0.5
    %v2086 = vmul.f32 %v2084, 0.5
    %v2087 = vand.u32 2147483647, %v2074
    %v2088 = vand.u32 2147483647, %v2075
    %2091 = vrot.lane.b32.xlu0 %v2087, 96
    %v2092 = vpop.permute.xlu0 %2091
    %2093 = vrot.lane.b32.xlu0 %v2088, 96
    %v2094 = vpop.permute.xlu0 %2093
    %v2095 = vsel %vm2003, %v2092, %v2094
    %vm2098 = vcmask 1043458
    %v2099 = vsel %vm2098, %v2095, 0.0
    %vm2100 = vcmask 781314
    %v2101 = vsel %vm2100, %v2094, 0.0
    %v2102 = vadd.f32 %v2099, %v2101
    %2103 = vadd.xlane.f32.xlu0 %v2102
    %v2104 = vpop.xlane.xlu0 %2103
    %v2105 = vand.u32 2147483647, %v2085
    %v2106 = vand.u32 2147483647, %v2086
    %v2107 = vmul.f32 %v2105, %v2026
    %v2108 = vmul.f32 %v2106, %v2029
    %2111 = vrot.lane.b32.xlu0 %v2107, 126
    %v2112 = vpop.permute.xlu0 %2111
    %2113 = vrot.lane.b32.xlu0 %v2108, 126
    %v2114 = vpop.permute.xlu0 %2113
    %v2115 = vsel %vm2040, %v2112, %v2114
    %v2118 = vsel %vm2098, %v2115, 0.0
    %vm2119 = vcmask 1027074
    %v2120 = vsel %vm2119, %v2114, 0.0
    %v2121 = vadd.f32 %v2118, %v2120
    %2122 = vadd.xlane.f32.xlu0 %v2121
    %v2123 = vpop.xlane.xlu0 %2122
    %v2124 = vadd.f32 %v2104, %v2123
    %v2125 = vmul.f32 %v2124, %v2124
    %v2126 = vadd.f32 %v2125, 1e-06
    %v2127 = vrsqrt.pop %v2126
    %v2128 = vmul.f32 %v2126, %v2127
    %vm2129 = vcmp.eq.f32.partialorder %v2126, inf
    %v2130 = vsel %vm2129, %v2126, %v2128
    %vm2131 = vcmp.eq.f32.partialorder %v2126, 0.0
    %v2132 = vand.u32 %v2126, 2147483648
    %v2133 = vsel %vm2131, %v2132, %v2130
    %s2134 = scalar_lea.vmem %s0, 3
    %v2135 = vld [vmem:[%s2134] ss:$8 sm:$0x3]
    %s2136 = scalar_lea.vmem %s0, 4
    %v2137 = vld [vmem:[%s2136] ss:$8 sm:$0x3]
    %v2139 = vlaneseq
    %v2140 = vshrl.u32 %v2139, 7
    %v2141 = vsub.s32 0, %v2140
    %v2142 = vrot.slane %v2135, %v2141
    %v2143 = vlaneseq
    %v2144 = vshrl.u32 %v2143, 7
    %v2145 = vsub.s32 1, %v2144
    %v2146 = vrot.slane %v2135, %v2145
    %v2149 = vmul.f32 %v2133, %v2142
    %v2150 = vmul.f32 %v2133, %v2146
    %v2151 = vmul.f32 %v2149, %v2142
    %v2152 = vmul.f32 %v2150, %v2146
    %v2155 = vrot.slane %v2151, 1
    %v2156 = vrot.slane %v2152, 1
    %v2159 = vadd.f32 %v2062, %v2155
    %v2160 = vadd.f32 %v2062, %v2156
    %v2161 = vsub.f32 %v2135, 1.0
    %v2162 = vmul.f32 %v2161, %v2161
    %v2163 = vmul.f32 %v2162, 100.9375
    %v2165 = vlaneseq
    %v2166 = vshrl.u32 %v2165, 7
    %v2167 = vsub.s32 0, %v2166
    %v2168 = vrot.slane %v2163, %v2167
    %v2169 = vlaneseq
    %v2170 = vshrl.u32 %v2169, 7
    %v2171 = vsub.s32 1, %v2170
    %v2172 = vrot.slane %v2163, %v2171
    %v2175 = vadd.f32 %v2159, %v2168
    %v2176 = vadd.f32 %v2160, %v2172
    %v2178 = vlaneseq
    %v2179 = vshrl.u32 %v2178, 7
    %v2180 = vsub.s32 0, %v2179
    %v2181 = vrot.slane %v2137, %v2180
    %v2182 = vlaneseq
    %v2183 = vshrl.u32 %v2182, 7
    %v2184 = vsub.s32 1, %v2183
    %v2185 = vrot.slane %v2137, %v2184
    %v2188 = vmul.f32 %v2175, %v2181
    %v2189 = vmul.f32 %v2176, %v2185
    %v2190 = vmul.f32 %v2125, 0.25
    %v2192 = vrot.slane %v2190, 2
    %v2194 = vadd.f32 %v2188, %v2192
    %v2195 = vadd.f32 %v2189, %v2192
    %v2198 = vrot.slane %v2194, 1
    %v2199 = vrot.slane %v2195, 1
    %v2202 = vsel %vm1955, %v2198, 0.0
    %v2203 = vsel %vm1955, %v2199, 0.0
    %v2204 = vadd.f32 %v2202, %v2203
    %2205 = vadd.xlane.f32.xlu0 %v2204
    %v2206 = vpop.xlane.xlu0 %2205
    %v2207 = vrot.slane %v2206, 4
    %v2208 = vadd.f32 %v2206, %v2207
    %v2209 = vrot.slane %v2208, 2
    %v2210 = vadd.f32 %v2208, %v2209
    %v2211 = vrot.slane %v2210, 1
    %v2212 = vadd.f32 %v2210, %v2211
    %s2213 = vtos %v2212
    %v2214 = vstv %s2213
    %v2215 = vmul.f32 %v2214, 0.00390625
    %v2216 = vlaneseq
    %v2217 = vand.u32 %v2216, 127
    %vm2218 = vcmp.eq.s32.totalorder %v2217, 0
    %v2219 = vsel %vm2218, %v2215, 0.0
    %vm2220 = vcmp.eq.s32.totalorder %v2217, 1
    %v2221 = vsel %vm2220, %v2133, 0.0
    %v2222 = vadd.f32 %v2219, %v2221
    %vm2223 = vcmp.eq.s32.totalorder %v2217, 2
    %v2224 = vsel %vm2223, %v2062, 0.0
    %v2226 = vrot.slane %v2224, 7
    %v2228 = vadd.f32 %v2222, %v2226
    %2229 = vst [vmem:[%s2 - $0x2] sm:$0x4] %v2228
    // Predicated region
    $region14: #{el_loss_forward.1} parent=1 // pred_check
      _
    $region15: #{el_loss_forward.1} parent=1 // pred_check_branch
      %2231 = sbr.rel (0) target = $region17
    $region16: #{el_loss_forward.1} parent=1 // pred_region
      _
    $region17: #{el_loss_forward.1} parent=1 // pred_fallthru
      _
    // Predicated region
    $region18: #{el_loss_forward.1} parent=1 // pred_check
      _
    $region19: #{el_loss_forward.1} parent=1 // pred_check_branch
      %2233 = sbr.rel (0) target = $region21
    $region20: #{el_loss_forward.1} parent=1 // pred_region
      _
    $region21: #{el_loss_forward.1} parent=1 // pred_fallthru
      _
    %2234 = vsyncpa [#allocation3], 1

</llo_original>
